<compile_context>
chip_gen: v7x
topology: tpu7x:2x2x1
jax: 0.10.0
libtpu: 0.0.40
codegen_flags: <defaults>
</compile_context>

<pallas_src>
import functools

import jax
import jax.numpy as jnp
from jax import lax
from jax.experimental import pallas as pl
from jax.experimental.pallas import tpu as pltpu


def _round_up(x, m):
    return (x + m - 1) // m * m


def _gru_block_kernel(gi_ref, am_ref, whh_ref, bhh_ref, o_ref, h_ref, *,
                      gru_type, time_block, h_pad):
    """One grid step = `time_block` timesteps of the attention GRU.

    Block shapes seen inside the kernel:
      gi_ref  : (Tb, Bb, G*Hp)  precomputed x-projection (+ b_ih), gate-padded
      am_ref  : (Tb, Bb, 2)     [:, :, 0] = att score, [:, :, 1] = validity mask
      whh_ref : (Hp, G*Hp)      W_hh^T, gate-padded (VMEM-resident)
      bhh_ref : (1,  G*Hp)      b_hh, gate-padded   (VMEM-resident)
      o_ref   : (Tb, Bb, Hp)    output slab (lane-dense, padded hidden)
      h_ref   : (Bb, Hp) f32    carried hidden state (scratch)
    """
    t_blk = pl.program_id(1)

    @pl.when(t_blk == 0)
    def _():
        h_ref[...] = jnp.zeros_like(h_ref)   # hx defaults to zeros in the module

    whh = whh_ref[...]                                             # (Hp, G*Hp)
    bb = h_ref.shape[0]
    # Hoisted bias broadcast (done once per grid step, not once per timestep).
    bhh = jnp.broadcast_to(bhh_ref[...].astype(jnp.float32),
                           (bb, bhh_ref.shape[1]))

    def step(i, h):
        gi = gi_ref[i].astype(jnp.float32)                         # (Bb, G*Hp)
        am = am_ref[i].astype(jnp.float32)                         # (Bb, 2)
        att = am[:, 0:1]
        msk = am[:, 1:2]

        # gh = h @ W_hh^T + b_hh   (MXU, f32 accumulation)
        gh = jnp.dot(h.astype(whh.dtype), whh,
                     preferred_element_type=jnp.float32) + bhh     # (Bb, G*Hp)

        i_r, h_r = gi[:, :h_pad], gh[:, :h_pad]
        if gru_type == "AGRU":
            i_n, h_n = gi[:, h_pad:2 * h_pad], gh[:, h_pad:2 * h_pad]
            reset = jax.nn.sigmoid(i_r + h_r)
            new_state = jnp.tanh(i_n + reset * h_n)
            hy = (1.0 - att) * h + att * new_state
        else:  # AUGRU
            i_z, h_z = gi[:, h_pad:2 * h_pad], gh[:, h_pad:2 * h_pad]
            i_n, h_n = gi[:, 2 * h_pad:3 * h_pad], gh[:, 2 * h_pad:3 * h_pad]
            reset = jax.nn.sigmoid(i_r + h_r)
            update = att * jax.nn.sigmoid(i_z + h_z)
            new_state = jnp.tanh(i_n + reset * h_n)
            hy = (1.0 - update) * h + update * new_state

        # Packed-sequence semantics: rows past their length keep the old state
        # and write zeros to the output buffer.
        o_ref[i] = (msk * hy).astype(o_ref.dtype)                  # lane-dense store
        return msk * hy + (1.0 - msk) * h

    h_ref[...] = lax.fori_loop(0, time_block, step, h_ref[...], unroll=True)


def dynamic_gru_forward(x, att_scores, mask, weight_ih, weight_hh,
                        bias_ih=None, bias_hh=None, *, gru_type="AGRU",
                        time_block=None, batch_block=None):
    """DynamicGRU forward on padded, time-major data.

    x          : (T, B, input_size)
    att_scores : (T, B)
    mask       : (T, B)  1.0 for valid steps (t < length[b]), else 0.0
    weight_ih  : (3H, input_size)   (PyTorch layout, gate order r|z|n)
    weight_hh  : (3H, H)
    bias_ih/hh : (3H,) or None
    returns    : (T, B, H)  hidden outputs, zero at masked positions
    """
    assert gru_type in ("AGRU", "AUGRU")
    T, B, I = x.shape
    H = weight_hh.shape[1]
    assert weight_hh.shape[0] == 3 * H and weight_ih.shape == (3 * H, I)

    # AGRU never uses the z gate -> drop it entirely (1/3 fewer FLOPs / weights).
    gate_ids = (0, 2) if gru_type == "AGRU" else (0, 1, 2)
    G = len(gate_ids)
    Hp = _round_up(H, 128)                      # lane-dense gate segments

    pdt = jnp.result_type(x.dtype, weight_ih.dtype)   # matmul operand dtype (bf16 stays bf16)

    wih_t = jnp.asarray(weight_ih, pdt).T              # (I, 3H)
    whh_t = jnp.asarray(weight_hh, pdt).T              # (H, 3H)
    b_ih = (jnp.zeros((3 * H,), jnp.float32) if bias_ih is None
            else jnp.asarray(bias_ih, jnp.float32))
    b_hh = (jnp.zeros((3 * H,), jnp.float32) if bias_hh is None
            else jnp.asarray(bias_hh, jnp.float32))

    def pack_cols(mat_t):
        # (K, 3H) -> (K, G*Hp): each kept gate in its own lane-aligned Hp slot.
        out = jnp.zeros((mat_t.shape[0], G * Hp), mat_t.dtype)
        for k, g in enumerate(gate_ids):
            out = out.at[:, k * Hp:k * Hp + H].set(mat_t[:, g * H:(g + 1) * H])
        return out

    def pack_bias(b):
        out = jnp.zeros((1, G * Hp), jnp.float32)
        for k, g in enumerate(gate_ids):
            out = out.at[0, k * Hp:k * Hp + H].set(b[g * H:(g + 1) * H])
        return out

    wih_p = pack_cols(wih_t)                                             # (I,  G*Hp)
    whh_p = pack_cols(jnp.zeros((Hp, 3 * H), pdt).at[:H].set(whh_t))     # (Hp, G*Hp)
    bih_p = pack_bias(b_ih)                                              # (1,  G*Hp)
    bhh_p = pack_bias(b_hh)                                              # (1,  G*Hp)

    # ---- hoisted input projection: one big (T*B, I) x (I, G*Hp) matmul (XLA).
    gi_all = (jnp.dot(x.reshape(T * B, I).astype(pdt), wih_p,
                      preferred_element_type=jnp.float32)
              + bih_p).reshape(T, B, G * Hp).astype(pdt)

    # ---- padding / tiling.  Padded timesteps carry mask=0 -> h unchanged,
    #      output zero; padded batch rows / hidden lanes stay zero throughout.
    Tb = time_block if time_block is not None else min(T, 16)
    Tp = _round_up(T, Tb)
    Bp = _round_up(B, 8)
    Bb = batch_block if batch_block is not None else Bp   # split batch on v7x (2 TC)
    assert Bb % 8 == 0 and Bp % Bb == 0

    gi_all = jnp.pad(gi_all, ((0, Tp - T), (0, Bp - B), (0, 0)))
    am = jnp.stack([att_scores.astype(jnp.float32),
                    mask.astype(jnp.float32)], axis=-1)                  # (T, B, 2)
    am = jnp.pad(am, ((0, Tp - T), (0, Bp - B), (0, 0)))

    nb, nt = Bp // Bb, Tp // Tb

    kernel = functools.partial(_gru_block_kernel, gru_type=gru_type,
                               time_block=Tb, h_pad=Hp)

    out = pl.pallas_call(
        kernel,
        out_shape=jax.ShapeDtypeStruct((Tp, Bp, Hp), x.dtype),
        grid_spec=pltpu.PrefetchScalarGridSpec(
            num_scalar_prefetch=0,
            grid=(nb, nt),
            in_specs=[
                pl.BlockSpec((Tb, Bb, G * Hp), lambda b, t: (t, b, 0)),  # gi block
                pl.BlockSpec((Tb, Bb, 2), lambda b, t: (t, b, 0)),       # [att, mask]
                pl.BlockSpec((Hp, G * Hp), lambda b, t: (0, 0)),         # W_hh^T (resident)
                pl.BlockSpec((1, G * Hp), lambda b, t: (0, 0)),          # b_hh   (resident)
            ],
            out_specs=pl.BlockSpec((Tb, Bb, Hp), lambda b, t: (t, b, 0)),
            scratch_shapes=[pltpu.VMEM((Bb, Hp), jnp.float32)],          # carried h
        ),
        compiler_params=pltpu.CompilerParams(
            # batch tiles are independent ("parallel"); the time axis is a true
            # recurrence carried in scratch -> must stay "arbitrary"/sequential.
            dimension_semantics=("parallel", "arbitrary"),
        ),
    )(gi_all, am, whh_p, bhh_p)

    return out[:T, :B, :H]


def dynamic_gru_reference(x, att_scores, mask, weight_ih, weight_hh,
                          bias_ih, bias_hh, *, gru_type="AGRU"):
    """Pure-JAX reference matching the PyTorch packed-sequence loop."""
    T, B, I = x.shape
    H = weight_hh.shape[1]
    wihT = jnp.asarray(weight_ih, jnp.float32).T
    whhT = jnp.asarray(weight_hh, jnp.float32).T
    b_ih = jnp.asarray(bias_ih, jnp.float32)
    b_hh = jnp.asarray(bias_hh, jnp.float32)

    h = jnp.zeros((B, H), jnp.float32)
    outs = []
    for t in range(T):
        gi = x[t].astype(jnp.float32) @ wihT + b_ih
        gh = h @ whhT + b_hh
        i_r, i_z, i_n = jnp.split(gi, 3, axis=1)
        h_r, h_z, h_n = jnp.split(gh, 3, axis=1)
        reset = jax.nn.sigmoid(i_r + h_r)
        new_state = jnp.tanh(i_n + reset * h_n)
        a = att_scores[t].astype(jnp.float32)[:, None]
        if gru_type == "AGRU":
            hy = (1.0 - a) * h + a * new_state
        else:
            upd = a * jax.nn.sigmoid(i_z + h_z)
            hy = (1.0 - upd) * h + upd * new_state
        m = mask[t].astype(jnp.float32)[:, None]
        h = m * hy + (1.0 - m) * h
        outs.append(m * hy)
    return jnp.stack(outs).astype(x.dtype)


if __name__ == "__main__":
    key = jax.random.PRNGKey(0)
    k1, k2, k3, k4, k5, k6 = jax.random.split(key, 6)

    # Small shapes: batch=8, seq=8, input_size=16, hidden=32
    B, T, I, H = 8, 8, 16, 32

    x = jax.random.normal(k1, (T, B, I), dtype=jnp.float32)
    att = jax.nn.sigmoid(jax.random.normal(k2, (T, B), dtype=jnp.float32))
    lengths = jnp.array([8, 7, 6, 5, 4, 3, 2, 1], dtype=jnp.int32)  # packed => sorted desc
    mask = (jnp.arange(T)[:, None] < lengths[None, :]).astype(jnp.float32)  # (T, B)

    weight_ih = 0.1 * jax.random.normal(k3, (3 * H, I), dtype=jnp.float32)
    weight_hh = 0.1 * jax.random.normal(k4, (3 * H, H), dtype=jnp.float32)
    bias_ih = 0.1 * jax.random.normal(k5, (3 * H,), dtype=jnp.float32)
    bias_hh = 0.1 * jax.random.normal(k6, (3 * H,), dtype=jnp.float32)

    for gru_type in ("AGRU", "AUGRU"):
        out = dynamic_gru_forward(x, att, mask, weight_ih, weight_hh,
                                  bias_ih, bias_hh, gru_type=gru_type)
        out = jax.block_until_ready(out)
        ref = dynamic_gru_reference(x, att, mask, weight_ih, weight_hh,
                                    bias_ih, bias_hh, gru_type=gru_type)
        assert out.shape == (T, B, H), out.shape
        err = jnp.max(jnp.abs(out - ref))
        assert jnp.allclose(out, ref, atol=1e-5, rtol=1e-5), (gru_type, err)

    print("KERNEL_OK")
</pallas_src>

<mosaic_0001>
module attributes {stable_mosaic.version = 11 : i64} {
  func.func @_gru_block_kernel(%arg0: i32, %arg1: i32, %arg2: memref<8x8x256xf32, #tpu.memory_space<vmem>>, %arg3: memref<8x8x2xf32, #tpu.memory_space<vmem>>, %arg4: memref<128x256xf32, #tpu.memory_space<vmem>>, %arg5: memref<1x256xf32, #tpu.memory_space<vmem>>, %arg6: memref<8x8x128xf32, #tpu.memory_space<vmem>>, %arg7: memref<8x128xf32, #tpu.memory_space<vmem>>) attributes {dimension_semantics = [#tpu.dimension_semantics<parallel>, #tpu.dimension_semantics<arbitrary>], iteration_bounds = array<i64: 1, 1>, scalar_prefetch = 0 : i64, scratch_operands = 1 : i64, tpu.core_type = #tpu.core_type<tc>, window_params = [{transform_indices = @transform_0, window_bounds = array<i64: 8, 8, 256>}, {transform_indices = @transform_1, window_bounds = array<i64: 8, 8, 2>}, {pipeline_mode = #tpu.pipeline_mode<synchronous>, transform_indices = @transform_2, window_bounds = array<i64: 128, 256>}, {pipeline_mode = #tpu.pipeline_mode<synchronous>, transform_indices = @transform_3, window_bounds = array<i64: 1, 256>}, {transform_indices = @transform_4, window_bounds = array<i64: 8, 8, 128>}]} {
    %c0_i32 = arith.constant 0 : i32
    %0 = arith.cmpi eq, %arg1, %c0_i32 : i32
    %1 = arith.extui %0 : i1 to i32
    %c0_i32_0 = arith.constant 0 : i32
    %2 = arith.cmpi ne, %1, %c0_i32_0 : i32
    scf.if %2 {
      %cst_88 = arith.constant 0.000000e+00 : f32
      %353 = vector.broadcast %cst_88 : f32 to vector<8x128xf32>
      %c0_89 = arith.constant 0 : index
      %c0_90 = arith.constant 0 : index
      %354 = vector.load %arg7[%c0_89, %c0_90] : memref<8x128xf32, #tpu.memory_space<vmem>>, vector<8x128xf32>
      tpu.vector_store %arg7[%c0_89, %c0_90], %353 {strides = array<i32>} : memref<8x128xf32, #tpu.memory_space<vmem>>, vector<8x128xf32>,
    } else {
    }
    %c0 = arith.constant 0 : index
    %c0_1 = arith.constant 0 : index
    %3 = vector.load %arg4[%c0, %c0_1] : memref<128x256xf32, #tpu.memory_space<vmem>>, vector<128x256xf32>
    %c0_2 = arith.constant 0 : index
    %c0_3 = arith.constant 0 : index
    %4 = vector.load %arg5[%c0_2, %c0_3] : memref<1x256xf32, #tpu.memory_space<vmem>>, vector<1x256xf32>
    %5 = vector.shape_cast %4 : vector<1x256xf32> to vector<1x256xf32>
    %6 = vector.broadcast %5 : vector<1x256xf32> to vector<8x256xf32>
    %c0_4 = arith.constant 0 : index
    %c0_5 = arith.constant 0 : index
    %7 = vector.load %arg7[%c0_4, %c0_5] : memref<8x128xf32, #tpu.memory_space<vmem>>, vector<8x128xf32>
    %c0_i32_6 = arith.constant 0 : i32
    %8 = arith.index_cast %c0_i32_6 : i32 to index
    %c0_7 = arith.constant 0 : index
    %c0_8 = arith.constant 0 : index
    %9 = vector.load %arg2[%8, %c0_7, %c0_8] : memref<8x8x256xf32, #tpu.memory_space<vmem>>, vector<1x8x256xf32>
    %10 = vector.shape_cast %9 : vector<1x8x256xf32> to vector<8x256xf32>
    %11 = arith.index_cast %c0_i32_6 : i32 to index
    %c0_9 = arith.constant 0 : index
    %c0_10 = arith.constant 0 : index
    %12 = vector.load %arg3[%11, %c0_9, %c0_10] : memref<8x8x2xf32, #tpu.memory_space<vmem>>, vector<1x8x2xf32>
    %13 = vector.shape_cast %12 : vector<1x8x2xf32> to vector<8x2xf32>
    %14 = vector.extract_strided_slice %13 {offsets = [0, 0], sizes = [8, 1], strides = [1, 1]} : vector<8x2xf32> to vector<8x1xf32>
    %15 = vector.extract_strided_slice %13 {offsets = [0, 1], sizes = [8, 1], strides = [1, 1]} : vector<8x2xf32> to vector<8x1xf32>
    %cst = arith.constant dense<0.000000e+00> : vector<8x256xf32>
    %16 = tpu.matmul %7, %3, %cst {dimension_numbers = #tpu.dot_dimension_numbers<[1], [0], [0], [1], [0, 0, 1, 1], [], []>} : vector<8x128xf32>, vector<128x256xf32>, vector<8x256xf32> -> vector<8x256xf32>
    %17 = arith.addf %16, %6 : vector<8x256xf32>
    %18 = vector.extract_strided_slice %10 {offsets = [0, 0], sizes = [8, 128], strides = [1, 1]} : vector<8x256xf32> to vector<8x128xf32>
    %19 = vector.extract_strided_slice %17 {offsets = [0, 0], sizes = [8, 128], strides = [1, 1]} : vector<8x256xf32> to vector<8x128xf32>
    %20 = vector.extract_strided_slice %10 {offsets = [0, 128], sizes = [8, 128], strides = [1, 1]} : vector<8x256xf32> to vector<8x128xf32>
    %21 = vector.extract_strided_slice %17 {offsets = [0, 128], sizes = [8, 128], strides = [1, 1]} : vector<8x256xf32> to vector<8x128xf32>
    %22 = arith.addf %18, %19 : vector<8x128xf32>
    %23 = arith.negf %22 : vector<8x128xf32>
    %24 = math.exp %23 : vector<8x128xf32>
    %cst_11 = arith.constant 1.000000e+00 : f32
    %25 = vector.broadcast %cst_11 : f32 to vector<8x128xf32>
    %26 = arith.addf %25, %24 : vector<8x128xf32>
    %27 = arith.divf %25, %26 : vector<8x128xf32>
    %28 = arith.mulf %27, %21 : vector<8x128xf32>
    %29 = arith.addf %20, %28 : vector<8x128xf32>
    %30 = math.tanh %29 : vector<8x128xf32>
    %cst_12 = arith.constant 1.000000e+00 : f32
    %31 = vector.broadcast %cst_12 : f32 to vector<8x1xf32>
    %32 = arith.subf %31, %14 : vector<8x1xf32>
    %33 = vector.broadcast %32 : vector<8x1xf32> to vector<8x128xf32>
    %34 = arith.mulf %33, %7 : vector<8x128xf32>
    %35 = vector.broadcast %14 : vector<8x1xf32> to vector<8x128xf32>
    %36 = arith.mulf %35, %30 : vector<8x128xf32>
    %37 = arith.addf %34, %36 : vector<8x128xf32>
    %38 = vector.broadcast %15 : vector<8x1xf32> to vector<8x128xf32>
    %39 = arith.mulf %38, %37 : vector<8x128xf32>
    %40 = arith.index_cast %c0_i32_6 : i32 to index
    %c0_13 = arith.constant 0 : index
    %c0_14 = arith.constant 0 : index
    %41 = vector.load %arg6[%40, %c0_13, %c0_14] : memref<8x8x128xf32, #tpu.memory_space<vmem>>, vector<1x8x128xf32>
    %42 = vector.shape_cast %41 : vector<1x8x128xf32> to vector<8x128xf32>
    %43 = vector.shape_cast %39 : vector<8x128xf32> to vector<1x8x128xf32>
    tpu.vector_store %arg6[%40, %c0_13, %c0_14], %43 {strides = array<i32>} : memref<8x8x128xf32, #tpu.memory_space<vmem>>, vector<1x8x128xf32>,
    %44 = vector.broadcast %15 : vector<8x1xf32> to vector<8x128xf32>
    %45 = arith.mulf %44, %37 : vector<8x128xf32>
    %cst_15 = arith.constant 1.000000e+00 : f32
    %46 = vector.broadcast %cst_15 : f32 to vector<8x1xf32>
    %47 = arith.subf %46, %15 : vector<8x1xf32>
    %48 = vector.broadcast %47 : vector<8x1xf32> to vector<8x128xf32>
    %49 = arith.mulf %48, %7 : vector<8x128xf32>
    %50 = arith.addf %45, %49 : vector<8x128xf32>
    %c1_i32 = arith.constant 1 : i32
    %51 = arith.index_cast %c1_i32 : i32 to index
    %c0_16 = arith.constant 0 : index
    %c0_17 = arith.constant 0 : index
    %52 = vector.load %arg2[%51, %c0_16, %c0_17] : memref<8x8x256xf32, #tpu.memory_space<vmem>>, vector<1x8x256xf32>
    %53 = vector.shape_cast %52 : vector<1x8x256xf32> to vector<8x256xf32>
    %54 = arith.index_cast %c1_i32 : i32 to index
    %c0_18 = arith.constant 0 : index
    %c0_19 = arith.constant 0 : index
    %55 = vector.load %arg3[%54, %c0_18, %c0_19] : memref<8x8x2xf32, #tpu.memory_space<vmem>>, vector<1x8x2xf32>
    %56 = vector.shape_cast %55 : vector<1x8x2xf32> to vector<8x2xf32>
    %57 = vector.extract_strided_slice %56 {offsets = [0, 0], sizes = [8, 1], strides = [1, 1]} : vector<8x2xf32> to vector<8x1xf32>
    %58 = vector.extract_strided_slice %56 {offsets = [0, 1], sizes = [8, 1], strides = [1, 1]} : vector<8x2xf32> to vector<8x1xf32>
    %cst_20 = arith.constant dense<0.000000e+00> : vector<8x256xf32>
    %59 = tpu.matmul %50, %3, %cst_20 {dimension_numbers = #tpu.dot_dimension_numbers<[1], [0], [0], [1], [0, 0, 1, 1], [], []>} : vector<8x128xf32>, vector<128x256xf32>, vector<8x256xf32> -> vector<8x256xf32>
    %60 = arith.addf %59, %6 : vector<8x256xf32>
    %61 = vector.extract_strided_slice %53 {offsets = [0, 0], sizes = [8, 128], strides = [1, 1]} : vector<8x256xf32> to vector<8x128xf32>
    %62 = vector.extract_strided_slice %60 {offsets = [0, 0], sizes = [8, 128], strides = [1, 1]} : vector<8x256xf32> to vector<8x128xf32>
    %63 = vector.extract_strided_slice %53 {offsets = [0, 128], sizes = [8, 128], strides = [1, 1]} : vector<8x256xf32> to vector<8x128xf32>
    %64 = vector.extract_strided_slice %60 {offsets = [0, 128], sizes = [8, 128], strides = [1, 1]} : vector<8x256xf32> to vector<8x128xf32>
    %65 = arith.addf %61, %62 : vector<8x128xf32>
    %66 = arith.negf %65 : vector<8x128xf32>
    %67 = math.exp %66 : vector<8x128xf32>
    %cst_21 = arith.constant 1.000000e+00 : f32
    %68 = vector.broadcast %cst_21 : f32 to vector<8x128xf32>
    %69 = arith.addf %68, %67 : vector<8x128xf32>
    %70 = arith.divf %68, %69 : vector<8x128xf32>
    %71 = arith.mulf %70, %64 : vector<8x128xf32>
    %72 = arith.addf %63, %71 : vector<8x128xf32>
    %73 = math.tanh %72 : vector<8x128xf32>
    %cst_22 = arith.constant 1.000000e+00 : f32
    %74 = vector.broadcast %cst_22 : f32 to vector<8x1xf32>
    %75 = arith.subf %74, %57 : vector<8x1xf32>
    %76 = vector.broadcast %75 : vector<8x1xf32> to vector<8x128xf32>
    %77 = arith.mulf %76, %50 : vector<8x128xf32>
    %78 = vector.broadcast %57 : vector<8x1xf32> to vector<8x128xf32>
    %79 = arith.mulf %78, %73 : vector<8x128xf32>
    %80 = arith.addf %77, %79 : vector<8x128xf32>
    %81 = vector.broadcast %58 : vector<8x1xf32> to vector<8x128xf32>
    %82 = arith.mulf %81, %80 : vector<8x128xf32>
    %83 = arith.index_cast %c1_i32 : i32 to index
    %c0_23 = arith.constant 0 : index
    %c0_24 = arith.constant 0 : index
    %84 = vector.load %arg6[%83, %c0_23, %c0_24] : memref<8x8x128xf32, #tpu.memory_space<vmem>>, vector<1x8x128xf32>
    %85 = vector.shape_cast %84 : vector<1x8x128xf32> to vector<8x128xf32>
    %86 = vector.shape_cast %82 : vector<8x128xf32> to vector<1x8x128xf32>
    tpu.vector_store %arg6[%83, %c0_23, %c0_24], %86 {strides = array<i32>} : memref<8x8x128xf32, #tpu.memory_space<vmem>>, vector<1x8x128xf32>,
    %87 = vector.broadcast %58 : vector<8x1xf32> to vector<8x128xf32>
    %88 = arith.mulf %87, %80 : vector<8x128xf32>
    %cst_25 = arith.constant 1.000000e+00 : f32
    %89 = vector.broadcast %cst_25 : f32 to vector<8x1xf32>
    %90 = arith.subf %89, %58 : vector<8x1xf32>
    %91 = vector.broadcast %90 : vector<8x1xf32> to vector<8x128xf32>
    %92 = arith.mulf %91, %50 : vector<8x128xf32>
    %93 = arith.addf %88, %92 : vector<8x128xf32>
    %c2_i32 = arith.constant 2 : i32
    %94 = arith.index_cast %c2_i32 : i32 to index
    %c0_26 = arith.constant 0 : index
    %c0_27 = arith.constant 0 : index
    %95 = vector.load %arg2[%94, %c0_26, %c0_27] : memref<8x8x256xf32, #tpu.memory_space<vmem>>, vector<1x8x256xf32>
    %96 = vector.shape_cast %95 : vector<1x8x256xf32> to vector<8x256xf32>
    %97 = arith.index_cast %c2_i32 : i32 to index
    %c0_28 = arith.constant 0 : index
    %c0_29 = arith.constant 0 : index
    %98 = vector.load %arg3[%97, %c0_28, %c0_29] : memref<8x8x2xf32, #tpu.memory_space<vmem>>, vector<1x8x2xf32>
    %99 = vector.shape_cast %98 : vector<1x8x2xf32> to vector<8x2xf32>
    %100 = vector.extract_strided_slice %99 {offsets = [0, 0], sizes = [8, 1], strides = [1, 1]} : vector<8x2xf32> to vector<8x1xf32>
    %101 = vector.extract_strided_slice %99 {offsets = [0, 1], sizes = [8, 1], strides = [1, 1]} : vector<8x2xf32> to vector<8x1xf32>
    %cst_30 = arith.constant dense<0.000000e+00> : vector<8x256xf32>
    %102 = tpu.matmul %93, %3, %cst_30 {dimension_numbers = #tpu.dot_dimension_numbers<[1], [0], [0], [1], [0, 0, 1, 1], [], []>} : vector<8x128xf32>, vector<128x256xf32>, vector<8x256xf32> -> vector<8x256xf32>
    %103 = arith.addf %102, %6 : vector<8x256xf32>
    %104 = vector.extract_strided_slice %96 {offsets = [0, 0], sizes = [8, 128], strides = [1, 1]} : vector<8x256xf32> to vector<8x128xf32>
    %105 = vector.extract_strided_slice %103 {offsets = [0, 0], sizes = [8, 128], strides = [1, 1]} : vector<8x256xf32> to vector<8x128xf32>
    %106 = vector.extract_strided_slice %96 {offsets = [0, 128], sizes = [8, 128], strides = [1, 1]} : vector<8x256xf32> to vector<8x128xf32>
    %107 = vector.extract_strided_slice %103 {offsets = [0, 128], sizes = [8, 128], strides = [1, 1]} : vector<8x256xf32> to vector<8x128xf32>
    %108 = arith.addf %104, %105 : vector<8x128xf32>
    %109 = arith.negf %108 : vector<8x128xf32>
    %110 = math.exp %109 : vector<8x128xf32>
    %cst_31 = arith.constant 1.000000e+00 : f32
    %111 = vector.broadcast %cst_31 : f32 to vector<8x128xf32>
    %112 = arith.addf %111, %110 : vector<8x128xf32>
    %113 = arith.divf %111, %112 : vector<8x128xf32>
    %114 = arith.mulf %113, %107 : vector<8x128xf32>
    %115 = arith.addf %106, %114 : vector<8x128xf32>
    %116 = math.tanh %115 : vector<8x128xf32>
    %cst_32 = arith.constant 1.000000e+00 : f32
    %117 = vector.broadcast %cst_32 : f32 to vector<8x1xf32>
    %118 = arith.subf %117, %100 : vector<8x1xf32>
    %119 = vector.broadcast %118 : vector<8x1xf32> to vector<8x128xf32>
    %120 = arith.mulf %119, %93 : vector<8x128xf32>
    %121 = vector.broadcast %100 : vector<8x1xf32> to vector<8x128xf32>
    %122 = arith.mulf %121, %116 : vector<8x128xf32>
    %123 = arith.addf %120, %122 : vector<8x128xf32>
    %124 = vector.broadcast %101 : vector<8x1xf32> to vector<8x128xf32>
    %125 = arith.mulf %124, %123 : vector<8x128xf32>
    %126 = arith.index_cast %c2_i32 : i32 to index
    %c0_33 = arith.constant 0 : index
    %c0_34 = arith.constant 0 : index
    %127 = vector.load %arg6[%126, %c0_33, %c0_34] : memref<8x8x128xf32, #tpu.memory_space<vmem>>, vector<1x8x128xf32>
    %128 = vector.shape_cast %127 : vector<1x8x128xf32> to vector<8x128xf32>
    %129 = vector.shape_cast %125 : vector<8x128xf32> to vector<1x8x128xf32>
    tpu.vector_store %arg6[%126, %c0_33, %c0_34], %129 {strides = array<i32>} : memref<8x8x128xf32, #tpu.memory_space<vmem>>, vector<1x8x128xf32>,
    %130 = vector.broadcast %101 : vector<8x1xf32> to vector<8x128xf32>
    %131 = arith.mulf %130, %123 : vector<8x128xf32>
    %cst_35 = arith.constant 1.000000e+00 : f32
    %132 = vector.broadcast %cst_35 : f32 to vector<8x1xf32>
    %133 = arith.subf %132, %101 : vector<8x1xf32>
    %134 = vector.broadcast %133 : vector<8x1xf32> to vector<8x128xf32>
    %135 = arith.mulf %134, %93 : vector<8x128xf32>
    %136 = arith.addf %131, %135 : vector<8x128xf32>
    %c3_i32 = arith.constant 3 : i32
    %137 = arith.index_cast %c3_i32 : i32 to index
    %c0_36 = arith.constant 0 : index
    %c0_37 = arith.constant 0 : index
    %138 = vector.load %arg2[%137, %c0_36, %c0_37] : memref<8x8x256xf32, #tpu.memory_space<vmem>>, vector<1x8x256xf32>
    %139 = vector.shape_cast %138 : vector<1x8x256xf32> to vector<8x256xf32>
    %140 = arith.index_cast %c3_i32 : i32 to index
    %c0_38 = arith.constant 0 : index
    %c0_39 = arith.constant 0 : index
    %141 = vector.load %arg3[%140, %c0_38, %c0_39] : memref<8x8x2xf32, #tpu.memory_space<vmem>>, vector<1x8x2xf32>
    %142 = vector.shape_cast %141 : vector<1x8x2xf32> to vector<8x2xf32>
    %143 = vector.extract_strided_slice %142 {offsets = [0, 0], sizes = [8, 1], strides = [1, 1]} : vector<8x2xf32> to vector<8x1xf32>
    %144 = vector.extract_strided_slice %142 {offsets = [0, 1], sizes = [8, 1], strides = [1, 1]} : vector<8x2xf32> to vector<8x1xf32>
    %cst_40 = arith.constant dense<0.000000e+00> : vector<8x256xf32>
    %145 = tpu.matmul %136, %3, %cst_40 {dimension_numbers = #tpu.dot_dimension_numbers<[1], [0], [0], [1], [0, 0, 1, 1], [], []>} : vector<8x128xf32>, vector<128x256xf32>, vector<8x256xf32> -> vector<8x256xf32>
    %146 = arith.addf %145, %6 : vector<8x256xf32>
    %147 = vector.extract_strided_slice %139 {offsets = [0, 0], sizes = [8, 128], strides = [1, 1]} : vector<8x256xf32> to vector<8x128xf32>
    %148 = vector.extract_strided_slice %146 {offsets = [0, 0], sizes = [8, 128], strides = [1, 1]} : vector<8x256xf32> to vector<8x128xf32>
    %149 = vector.extract_strided_slice %139 {offsets = [0, 128], sizes = [8, 128], strides = [1, 1]} : vector<8x256xf32> to vector<8x128xf32>
    %150 = vector.extract_strided_slice %146 {offsets = [0, 128], sizes = [8, 128], strides = [1, 1]} : vector<8x256xf32> to vector<8x128xf32>
    %151 = arith.addf %147, %148 : vector<8x128xf32>
    %152 = arith.negf %151 : vector<8x128xf32>
    %153 = math.exp %152 : vector<8x128xf32>
    %cst_41 = arith.constant 1.000000e+00 : f32
    %154 = vector.broadcast %cst_41 : f32 to vector<8x128xf32>
    %155 = arith.addf %154, %153 : vector<8x128xf32>
    %156 = arith.divf %154, %155 : vector<8x128xf32>
    %157 = arith.mulf %156, %150 : vector<8x128xf32>
    %158 = arith.addf %149, %157 : vector<8x128xf32>
    %159 = math.tanh %158 : vector<8x128xf32>
    %cst_42 = arith.constant 1.000000e+00 : f32
    %160 = vector.broadcast %cst_42 : f32 to vector<8x1xf32>
    %161 = arith.subf %160, %143 : vector<8x1xf32>
    %162 = vector.broadcast %161 : vector<8x1xf32> to vector<8x128xf32>
    %163 = arith.mulf %162, %136 : vector<8x128xf32>
    %164 = vector.broadcast %143 : vector<8x1xf32> to vector<8x128xf32>
    %165 = arith.mulf %164, %159 : vector<8x128xf32>
    %166 = arith.addf %163, %165 : vector<8x128xf32>
    %167 = vector.broadcast %144 : vector<8x1xf32> to vector<8x128xf32>
    %168 = arith.mulf %167, %166 : vector<8x128xf32>
    %169 = arith.index_cast %c3_i32 : i32 to index
    %c0_43 = arith.constant 0 : index
    %c0_44 = arith.constant 0 : index
    %170 = vector.load %arg6[%169, %c0_43, %c0_44] : memref<8x8x128xf32, #tpu.memory_space<vmem>>, vector<1x8x128xf32>
    %171 = vector.shape_cast %170 : vector<1x8x128xf32> to vector<8x128xf32>
    %172 = vector.shape_cast %168 : vector<8x128xf32> to vector<1x8x128xf32>
    tpu.vector_store %arg6[%169, %c0_43, %c0_44], %172 {strides = array<i32>} : memref<8x8x128xf32, #tpu.memory_space<vmem>>, vector<1x8x128xf32>,
    %173 = vector.broadcast %144 : vector<8x1xf32> to vector<8x128xf32>
    %174 = arith.mulf %173, %166 : vector<8x128xf32>
    %cst_45 = arith.constant 1.000000e+00 : f32
    %175 = vector.broadcast %cst_45 : f32 to vector<8x1xf32>
    %176 = arith.subf %175, %144 : vector<8x1xf32>
    %177 = vector.broadcast %176 : vector<8x1xf32> to vector<8x128xf32>
    %178 = arith.mulf %177, %136 : vector<8x128xf32>
    %179 = arith.addf %174, %178 : vector<8x128xf32>
    %c4_i32 = arith.constant 4 : i32
    %180 = arith.index_cast %c4_i32 : i32 to index
    %c0_46 = arith.constant 0 : index
    %c0_47 = arith.constant 0 : index
    %181 = vector.load %arg2[%180, %c0_46, %c0_47] : memref<8x8x256xf32, #tpu.memory_space<vmem>>, vector<1x8x256xf32>
    %182 = vector.shape_cast %181 : vector<1x8x256xf32> to vector<8x256xf32>
    %183 = arith.index_cast %c4_i32 : i32 to index
    %c0_48 = arith.constant 0 : index
    %c0_49 = arith.constant 0 : index
    %184 = vector.load %arg3[%183, %c0_48, %c0_49] : memref<8x8x2xf32, #tpu.memory_space<vmem>>, vector<1x8x2xf32>
    %185 = vector.shape_cast %184 : vector<1x8x2xf32> to vector<8x2xf32>
    %186 = vector.extract_strided_slice %185 {offsets = [0, 0], sizes = [8, 1], strides = [1, 1]} : vector<8x2xf32> to vector<8x1xf32>
    %187 = vector.extract_strided_slice %185 {offsets = [0, 1], sizes = [8, 1], strides = [1, 1]} : vector<8x2xf32> to vector<8x1xf32>
    %cst_50 = arith.constant dense<0.000000e+00> : vector<8x256xf32>
    %188 = tpu.matmul %179, %3, %cst_50 {dimension_numbers = #tpu.dot_dimension_numbers<[1], [0], [0], [1], [0, 0, 1, 1], [], []>} : vector<8x128xf32>, vector<128x256xf32>, vector<8x256xf32> -> vector<8x256xf32>
    %189 = arith.addf %188, %6 : vector<8x256xf32>
    %190 = vector.extract_strided_slice %182 {offsets = [0, 0], sizes = [8, 128], strides = [1, 1]} : vector<8x256xf32> to vector<8x128xf32>
    %191 = vector.extract_strided_slice %189 {offsets = [0, 0], sizes = [8, 128], strides = [1, 1]} : vector<8x256xf32> to vector<8x128xf32>
    %192 = vector.extract_strided_slice %182 {offsets = [0, 128], sizes = [8, 128], strides = [1, 1]} : vector<8x256xf32> to vector<8x128xf32>
    %193 = vector.extract_strided_slice %189 {offsets = [0, 128], sizes = [8, 128], strides = [1, 1]} : vector<8x256xf32> to vector<8x128xf32>
    %194 = arith.addf %190, %191 : vector<8x128xf32>
    %195 = arith.negf %194 : vector<8x128xf32>
    %196 = math.exp %195 : vector<8x128xf32>
    %cst_51 = arith.constant 1.000000e+00 : f32
    %197 = vector.broadcast %cst_51 : f32 to vector<8x128xf32>
    %198 = arith.addf %197, %196 : vector<8x128xf32>
    %199 = arith.divf %197, %198 : vector<8x128xf32>
    %200 = arith.mulf %199, %193 : vector<8x128xf32>
    %201 = arith.addf %192, %200 : vector<8x128xf32>
    %202 = math.tanh %201 : vector<8x128xf32>
    %cst_52 = arith.constant 1.000000e+00 : f32
    %203 = vector.broadcast %cst_52 : f32 to vector<8x1xf32>
    %204 = arith.subf %203, %186 : vector<8x1xf32>
    %205 = vector.broadcast %204 : vector<8x1xf32> to vector<8x128xf32>
    %206 = arith.mulf %205, %179 : vector<8x128xf32>
    %207 = vector.broadcast %186 : vector<8x1xf32> to vector<8x128xf32>
    %208 = arith.mulf %207, %202 : vector<8x128xf32>
    %209 = arith.addf %206, %208 : vector<8x128xf32>
    %210 = vector.broadcast %187 : vector<8x1xf32> to vector<8x128xf32>
    %211 = arith.mulf %210, %209 : vector<8x128xf32>
    %212 = arith.index_cast %c4_i32 : i32 to index
    %c0_53 = arith.constant 0 : index
    %c0_54 = arith.constant 0 : index
    %213 = vector.load %arg6[%212, %c0_53, %c0_54] : memref<8x8x128xf32, #tpu.memory_space<vmem>>, vector<1x8x128xf32>
    %214 = vector.shape_cast %213 : vector<1x8x128xf32> to vector<8x128xf32>
    %215 = vector.shape_cast %211 : vector<8x128xf32> to vector<1x8x128xf32>
    tpu.vector_store %arg6[%212, %c0_53, %c0_54], %215 {strides = array<i32>} : memref<8x8x128xf32, #tpu.memory_space<vmem>>, vector<1x8x128xf32>,
    %216 = vector.broadcast %187 : vector<8x1xf32> to vector<8x128xf32>
    %217 = arith.mulf %216, %209 : vector<8x128xf32>
    %cst_55 = arith.constant 1.000000e+00 : f32
    %218 = vector.broadcast %cst_55 : f32 to vector<8x1xf32>
    %219 = arith.subf %218, %187 : vector<8x1xf32>
    %220 = vector.broadcast %219 : vector<8x1xf32> to vector<8x128xf32>
    %221 = arith.mulf %220, %179 : vector<8x128xf32>
    %222 = arith.addf %217, %221 : vector<8x128xf32>
    %c5_i32 = arith.constant 5 : i32
    %223 = arith.index_cast %c5_i32 : i32 to index
    %c0_56 = arith.constant 0 : index
    %c0_57 = arith.constant 0 : index
    %224 = vector.load %arg2[%223, %c0_56, %c0_57] : memref<8x8x256xf32, #tpu.memory_space<vmem>>, vector<1x8x256xf32>
    %225 = vector.shape_cast %224 : vector<1x8x256xf32> to vector<8x256xf32>
    %226 = arith.index_cast %c5_i32 : i32 to index
    %c0_58 = arith.constant 0 : index
    %c0_59 = arith.constant 0 : index
    %227 = vector.load %arg3[%226, %c0_58, %c0_59] : memref<8x8x2xf32, #tpu.memory_space<vmem>>, vector<1x8x2xf32>
    %228 = vector.shape_cast %227 : vector<1x8x2xf32> to vector<8x2xf32>
    %229 = vector.extract_strided_slice %228 {offsets = [0, 0], sizes = [8, 1], strides = [1, 1]} : vector<8x2xf32> to vector<8x1xf32>
    %230 = vector.extract_strided_slice %228 {offsets = [0, 1], sizes = [8, 1], strides = [1, 1]} : vector<8x2xf32> to vector<8x1xf32>
    %cst_60 = arith.constant dense<0.000000e+00> : vector<8x256xf32>
    %231 = tpu.matmul %222, %3, %cst_60 {dimension_numbers = #tpu.dot_dimension_numbers<[1], [0], [0], [1], [0, 0, 1, 1], [], []>} : vector<8x128xf32>, vector<128x256xf32>, vector<8x256xf32> -> vector<8x256xf32>
    %232 = arith.addf %231, %6 : vector<8x256xf32>
    %233 = vector.extract_strided_slice %225 {offsets = [0, 0], sizes = [8, 128], strides = [1, 1]} : vector<8x256xf32> to vector<8x128xf32>
    %234 = vector.extract_strided_slice %232 {offsets = [0, 0], sizes = [8, 128], strides = [1, 1]} : vector<8x256xf32> to vector<8x128xf32>
    %235 = vector.extract_strided_slice %225 {offsets = [0, 128], sizes = [8, 128], strides = [1, 1]} : vector<8x256xf32> to vector<8x128xf32>
    %236 = vector.extract_strided_slice %232 {offsets = [0, 128], sizes = [8, 128], strides = [1, 1]} : vector<8x256xf32> to vector<8x128xf32>
    %237 = arith.addf %233, %234 : vector<8x128xf32>
    %238 = arith.negf %237 : vector<8x128xf32>
    %239 = math.exp %238 : vector<8x128xf32>
    %cst_61 = arith.constant 1.000000e+00 : f32
    %240 = vector.broadcast %cst_61 : f32 to vector<8x128xf32>
    %241 = arith.addf %240, %239 : vector<8x128xf32>
    %242 = arith.divf %240, %241 : vector<8x128xf32>
    %243 = arith.mulf %242, %236 : vector<8x128xf32>
    %244 = arith.addf %235, %243 : vector<8x128xf32>
    %245 = math.tanh %244 : vector<8x128xf32>
    %cst_62 = arith.constant 1.000000e+00 : f32
    %246 = vector.broadcast %cst_62 : f32 to vector<8x1xf32>
    %247 = arith.subf %246, %229 : vector<8x1xf32>
    %248 = vector.broadcast %247 : vector<8x1xf32> to vector<8x128xf32>
    %249 = arith.mulf %248, %222 : vector<8x128xf32>
    %250 = vector.broadcast %229 : vector<8x1xf32> to vector<8x128xf32>
    %251 = arith.mulf %250, %245 : vector<8x128xf32>
    %252 = arith.addf %249, %251 : vector<8x128xf32>
    %253 = vector.broadcast %230 : vector<8x1xf32> to vector<8x128xf32>
    %254 = arith.mulf %253, %252 : vector<8x128xf32>
    %255 = arith.index_cast %c5_i32 : i32 to index
    %c0_63 = arith.constant 0 : index
    %c0_64 = arith.constant 0 : index
    %256 = vector.load %arg6[%255, %c0_63, %c0_64] : memref<8x8x128xf32, #tpu.memory_space<vmem>>, vector<1x8x128xf32>
    %257 = vector.shape_cast %256 : vector<1x8x128xf32> to vector<8x128xf32>
    %258 = vector.shape_cast %254 : vector<8x128xf32> to vector<1x8x128xf32>
    tpu.vector_store %arg6[%255, %c0_63, %c0_64], %258 {strides = array<i32>} : memref<8x8x128xf32, #tpu.memory_space<vmem>>, vector<1x8x128xf32>,
    %259 = vector.broadcast %230 : vector<8x1xf32> to vector<8x128xf32>
    %260 = arith.mulf %259, %252 : vector<8x128xf32>
    %cst_65 = arith.constant 1.000000e+00 : f32
    %261 = vector.broadcast %cst_65 : f32 to vector<8x1xf32>
    %262 = arith.subf %261, %230 : vector<8x1xf32>
    %263 = vector.broadcast %262 : vector<8x1xf32> to vector<8x128xf32>
    %264 = arith.mulf %263, %222 : vector<8x128xf32>
    %265 = arith.addf %260, %264 : vector<8x128xf32>
    %c6_i32 = arith.constant 6 : i32
    %266 = arith.index_cast %c6_i32 : i32 to index
    %c0_66 = arith.constant 0 : index
    %c0_67 = arith.constant 0 : index
    %267 = vector.load %arg2[%266, %c0_66, %c0_67] : memref<8x8x256xf32, #tpu.memory_space<vmem>>, vector<1x8x256xf32>
    %268 = vector.shape_cast %267 : vector<1x8x256xf32> to vector<8x256xf32>
    %269 = arith.index_cast %c6_i32 : i32 to index
    %c0_68 = arith.constant 0 : index
    %c0_69 = arith.constant 0 : index
    %270 = vector.load %arg3[%269, %c0_68, %c0_69] : memref<8x8x2xf32, #tpu.memory_space<vmem>>, vector<1x8x2xf32>
    %271 = vector.shape_cast %270 : vector<1x8x2xf32> to vector<8x2xf32>
    %272 = vector.extract_strided_slice %271 {offsets = [0, 0], sizes = [8, 1], strides = [1, 1]} : vector<8x2xf32> to vector<8x1xf32>
    %273 = vector.extract_strided_slice %271 {offsets = [0, 1], sizes = [8, 1], strides = [1, 1]} : vector<8x2xf32> to vector<8x1xf32>
    %cst_70 = arith.constant dense<0.000000e+00> : vector<8x256xf32>
    %274 = tpu.matmul %265, %3, %cst_70 {dimension_numbers = #tpu.dot_dimension_numbers<[1], [0], [0], [1], [0, 0, 1, 1], [], []>} : vector<8x128xf32>, vector<128x256xf32>, vector<8x256xf32> -> vector<8x256xf32>
    %275 = arith.addf %274, %6 : vector<8x256xf32>
    %276 = vector.extract_strided_slice %268 {offsets = [0, 0], sizes = [8, 128], strides = [1, 1]} : vector<8x256xf32> to vector<8x128xf32>
    %277 = vector.extract_strided_slice %275 {offsets = [0, 0], sizes = [8, 128], strides = [1, 1]} : vector<8x256xf32> to vector<8x128xf32>
    %278 = vector.extract_strided_slice %268 {offsets = [0, 128], sizes = [8, 128], strides = [1, 1]} : vector<8x256xf32> to vector<8x128xf32>
    %279 = vector.extract_strided_slice %275 {offsets = [0, 128], sizes = [8, 128], strides = [1, 1]} : vector<8x256xf32> to vector<8x128xf32>
    %280 = arith.addf %276, %277 : vector<8x128xf32>
    %281 = arith.negf %280 : vector<8x128xf32>
    %282 = math.exp %281 : vector<8x128xf32>
    %cst_71 = arith.constant 1.000000e+00 : f32
    %283 = vector.broadcast %cst_71 : f32 to vector<8x128xf32>
    %284 = arith.addf %283, %282 : vector<8x128xf32>
    %285 = arith.divf %283, %284 : vector<8x128xf32>
    %286 = arith.mulf %285, %279 : vector<8x128xf32>
    %287 = arith.addf %278, %286 : vector<8x128xf32>
    %288 = math.tanh %287 : vector<8x128xf32>
    %cst_72 = arith.constant 1.000000e+00 : f32
    %289 = vector.broadcast %cst_72 : f32 to vector<8x1xf32>
    %290 = arith.subf %289, %272 : vector<8x1xf32>
    %291 = vector.broadcast %290 : vector<8x1xf32> to vector<8x128xf32>
    %292 = arith.mulf %291, %265 : vector<8x128xf32>
    %293 = vector.broadcast %272 : vector<8x1xf32> to vector<8x128xf32>
    %294 = arith.mulf %293, %288 : vector<8x128xf32>
    %295 = arith.addf %292, %294 : vector<8x128xf32>
    %296 = vector.broadcast %273 : vector<8x1xf32> to vector<8x128xf32>
    %297 = arith.mulf %296, %295 : vector<8x128xf32>
    %298 = arith.index_cast %c6_i32 : i32 to index
    %c0_73 = arith.constant 0 : index
    %c0_74 = arith.constant 0 : index
    %299 = vector.load %arg6[%298, %c0_73, %c0_74] : memref<8x8x128xf32, #tpu.memory_space<vmem>>, vector<1x8x128xf32>
    %300 = vector.shape_cast %299 : vector<1x8x128xf32> to vector<8x128xf32>
    %301 = vector.shape_cast %297 : vector<8x128xf32> to vector<1x8x128xf32>
    tpu.vector_store %arg6[%298, %c0_73, %c0_74], %301 {strides = array<i32>} : memref<8x8x128xf32, #tpu.memory_space<vmem>>, vector<1x8x128xf32>,
    %302 = vector.broadcast %273 : vector<8x1xf32> to vector<8x128xf32>
    %303 = arith.mulf %302, %295 : vector<8x128xf32>
    %cst_75 = arith.constant 1.000000e+00 : f32
    %304 = vector.broadcast %cst_75 : f32 to vector<8x1xf32>
    %305 = arith.subf %304, %273 : vector<8x1xf32>
    %306 = vector.broadcast %305 : vector<8x1xf32> to vector<8x128xf32>
    %307 = arith.mulf %306, %265 : vector<8x128xf32>
    %308 = arith.addf %303, %307 : vector<8x128xf32>
    %c7_i32 = arith.constant 7 : i32
    %309 = arith.index_cast %c7_i32 : i32 to index
    %c0_76 = arith.constant 0 : index
    %c0_77 = arith.constant 0 : index
    %310 = vector.load %arg2[%309, %c0_76, %c0_77] : memref<8x8x256xf32, #tpu.memory_space<vmem>>, vector<1x8x256xf32>
    %311 = vector.shape_cast %310 : vector<1x8x256xf32> to vector<8x256xf32>
    %312 = arith.index_cast %c7_i32 : i32 to index
    %c0_78 = arith.constant 0 : index
    %c0_79 = arith.constant 0 : index
    %313 = vector.load %arg3[%312, %c0_78, %c0_79] : memref<8x8x2xf32, #tpu.memory_space<vmem>>, vector<1x8x2xf32>
    %314 = vector.shape_cast %313 : vector<1x8x2xf32> to vector<8x2xf32>
    %315 = vector.extract_strided_slice %314 {offsets = [0, 0], sizes = [8, 1], strides = [1, 1]} : vector<8x2xf32> to vector<8x1xf32>
    %316 = vector.extract_strided_slice %314 {offsets = [0, 1], sizes = [8, 1], strides = [1, 1]} : vector<8x2xf32> to vector<8x1xf32>
    %cst_80 = arith.constant dense<0.000000e+00> : vector<8x256xf32>
    %317 = tpu.matmul %308, %3, %cst_80 {dimension_numbers = #tpu.dot_dimension_numbers<[1], [0], [0], [1], [0, 0, 1, 1], [], []>} : vector<8x128xf32>, vector<128x256xf32>, vector<8x256xf32> -> vector<8x256xf32>
    %318 = arith.addf %317, %6 : vector<8x256xf32>
    %319 = vector.extract_strided_slice %311 {offsets = [0, 0], sizes = [8, 128], strides = [1, 1]} : vector<8x256xf32> to vector<8x128xf32>
    %320 = vector.extract_strided_slice %318 {offsets = [0, 0], sizes = [8, 128], strides = [1, 1]} : vector<8x256xf32> to vector<8x128xf32>
    %321 = vector.extract_strided_slice %311 {offsets = [0, 128], sizes = [8, 128], strides = [1, 1]} : vector<8x256xf32> to vector<8x128xf32>
    %322 = vector.extract_strided_slice %318 {offsets = [0, 128], sizes = [8, 128], strides = [1, 1]} : vector<8x256xf32> to vector<8x128xf32>
    %323 = arith.addf %319, %320 : vector<8x128xf32>
    %324 = arith.negf %323 : vector<8x128xf32>
    %325 = math.exp %324 : vector<8x128xf32>
    %cst_81 = arith.constant 1.000000e+00 : f32
    %326 = vector.broadcast %cst_81 : f32 to vector<8x128xf32>
    %327 = arith.addf %326, %325 : vector<8x128xf32>
    %328 = arith.divf %326, %327 : vector<8x128xf32>
    %329 = arith.mulf %328, %322 : vector<8x128xf32>
    %330 = arith.addf %321, %329 : vector<8x128xf32>
    %331 = math.tanh %330 : vector<8x128xf32>
    %cst_82 = arith.constant 1.000000e+00 : f32
    %332 = vector.broadcast %cst_82 : f32 to vector<8x1xf32>
    %333 = arith.subf %332, %315 : vector<8x1xf32>
    %334 = vector.broadcast %333 : vector<8x1xf32> to vector<8x128xf32>
    %335 = arith.mulf %334, %308 : vector<8x128xf32>
    %336 = vector.broadcast %315 : vector<8x1xf32> to vector<8x128xf32>
    %337 = arith.mulf %336, %331 : vector<8x128xf32>
    %338 = arith.addf %335, %337 : vector<8x128xf32>
    %339 = vector.broadcast %316 : vector<8x1xf32> to vector<8x128xf32>
    %340 = arith.mulf %339, %338 : vector<8x128xf32>
    %341 = arith.index_cast %c7_i32 : i32 to index
    %c0_83 = arith.constant 0 : index
    %c0_84 = arith.constant 0 : index
    %342 = vector.load %arg6[%341, %c0_83, %c0_84] : memref<8x8x128xf32, #tpu.memory_space<vmem>>, vector<1x8x128xf32>
    %343 = vector.shape_cast %342 : vector<1x8x128xf32> to vector<8x128xf32>
    %344 = vector.shape_cast %340 : vector<8x128xf32> to vector<1x8x128xf32>
    tpu.vector_store %arg6[%341, %c0_83, %c0_84], %344 {strides = array<i32>} : memref<8x8x128xf32, #tpu.memory_space<vmem>>, vector<1x8x128xf32>,
    %345 = vector.broadcast %316 : vector<8x1xf32> to vector<8x128xf32>
    %346 = arith.mulf %345, %338 : vector<8x128xf32>
    %cst_85 = arith.constant 1.000000e+00 : f32
    %347 = vector.broadcast %cst_85 : f32 to vector<8x1xf32>
    %348 = arith.subf %347, %316 : vector<8x1xf32>
    %349 = vector.broadcast %348 : vector<8x1xf32> to vector<8x128xf32>
    %350 = arith.mulf %349, %308 : vector<8x128xf32>
    %351 = arith.addf %346, %350 : vector<8x128xf32>
    %c8_i32 = arith.constant 8 : i32
    %c0_86 = arith.constant 0 : index
    %c0_87 = arith.constant 0 : index
    %352 = vector.load %arg7[%c0_86, %c0_87] : memref<8x128xf32, #tpu.memory_space<vmem>>, vector<8x128xf32>
    tpu.vector_store %arg7[%c0_86, %c0_87], %351 {strides = array<i32>} : memref<8x128xf32, #tpu.memory_space<vmem>>, vector<8x128xf32>,
    return
  }
  func.func @transform_0(%arg0: i32, %arg1: i32) -> (i32, i32, i32) {
    %c0_i32 = arith.constant 0 : i32
    %c0_i32_0 = arith.constant 0 : i32
    return %arg1, %arg0, %c0_i32 : i32, i32, i32
  }
  func.func @transform_1(%arg0: i32, %arg1: i32) -> (i32, i32, i32) {
    %c0_i32 = arith.constant 0 : i32
    %c0_i32_0 = arith.constant 0 : i32
    return %arg1, %arg0, %c0_i32 : i32, i32, i32
  }
  func.func @transform_2(%arg0: i32, %arg1: i32) -> (i32, i32) {
    %c0_i32 = arith.constant 0 : i32
    %c0_i32_0 = arith.constant 0 : i32
    %c0_i32_1 = arith.constant 0 : i32
    return %c0_i32, %c0_i32_0 : i32, i32
  }
  func.func @transform_3(%arg0: i32, %arg1: i32) -> (i32, i32) {
    %c0_i32 = arith.constant 0 : i32
    %c0_i32_0 = arith.constant 0 : i32
    %c0_i32_1 = arith.constant 0 : i32
    return %c0_i32, %c0_i32_0 : i32, i32
  }
  func.func @transform_4(%arg0: i32, %arg1: i32) -> (i32, i32, i32) {
    %c0_i32 = arith.constant 0 : i32
    %c0_i32_0 = arith.constant 0 : i32
    return %arg1, %arg0, %c0_i32 : i32, i32, i32
  }
}

</mosaic_0001>

<llo_original>
// kernel: tpu_custom_call.1
$region0: #{tpu_custom_call.1}
  #allocation0 [shape = 'u32[]', space=smem, size = 0x4, offset = 0x4, fixed_abs, tag = 'smem constant byte address 0x4 - core index']
  #allocation1 [shape = 'u32[144,128]{1,0:T(1,128)}', space=vmem, size = 0x12000, scoped, tag = 'internal scratch']
  #allocation2 [shape = 'f32[8,128]{1,0:T(8,128)}', space=vmem, size = 0x1000, scoped, tag = 'scratch operand']
  %s0 = inlined_call_operand.hbm [shape: f32[8,8,256], index: 0, kind: input, shape index: {}]
  %s1 = inlined_call_operand.vmem [shape: f32[8,8,2], index: 1, kind: input, shape index: {}]
  %s2 = inlined_call_operand.hbm [shape: f32[128,256], index: 2, kind: input, shape index: {}]
  %s3 = inlined_call_operand.vmem [shape: f32[1,256], index: 3, kind: input, shape index: {}]
  %s4 = inlined_call_operand.hbm [shape: f32[8,8,128], index: 4, kind: output, shape index: {}]
  %s5 = sld [smem:[#allocation0]]
  $region38: #{tpu_custom_call.1} parent=0
    _
  %s7 = ssub.s32 1, %s5
  %s8 = scalar_select 0, %s7, %s5
  $region1: #{tpu_custom_call.1} parent=0
    #allocation3 [shape = 'u8[65536]{0}', space=vmem, size = 0x10000, scoped, tag = 'input window, operand 0, single buffered']
    #allocation4 [shape = 's32[1]{0}', space=sflag, size = 0x4, scoped, tag = 'scoped memory for tpu_custom_call.1']
    #allocation5 [shape = 's32[1]{0}', space=sflag, size = 0x4, scoped, tag = 'scoped memory for tpu_custom_call.1']
    #allocation6 [shape = 'u8[131072]{0}', space=vmem, size = 0x20000, scoped, tag = 'input window, operand 2, single buffered']
    #allocation7 [shape = 's32[1]{0}', space=sflag, size = 0x4, scoped, tag = 'scoped memory for tpu_custom_call.1']
    #allocation8 [shape = 'u8[32768]{0}', space=vmem, size = 0x8000, scoped, tag = 'output window, operand 0, single buffered']
    %9 = vsyncpa [#allocation4], 0
    %10 = vsyncpa [#allocation7], 0
    %11 = vsyncpa [#allocation5], 0
    // Predicated region
    $region2: #{tpu_custom_call.1} parent=1 // pred_check
      _
    $region3: #{tpu_custom_call.1} parent=1 // pred_check_branch
      %13 = sbr.rel (0) target = $region5
    $region4: #{tpu_custom_call.1} parent=1 // pred_region
      %s15 = ssub.s32 2048, 2048
      %16 = vsyncadd [#allocation4], %s15
      %s17 = sshll.u32 [#allocation3], 4
      %s18 = int_to_ptr.vmem [resolvable:$true] %s17
      %23 = dma.hbm_to_vmem [thread:$0]  %s0, 2048, %s18, [#allocation4], 256, 256, 16
    $region5: #{tpu_custom_call.1} parent=1 // pred_fallthru
      _
    // Predicated region
    $region6: #{tpu_custom_call.1} parent=1 // pred_check
      _
    $region7: #{tpu_custom_call.1} parent=1 // pred_check_branch
      %25 = sbr.rel (0) target = $region9
    $region8: #{tpu_custom_call.1} parent=1 // pred_region
      _
    $region9: #{tpu_custom_call.1} parent=1 // pred_fallthru
      _
    // Predicated region
    $region10: #{tpu_custom_call.1} parent=1 // pred_check
      _
    $region11: #{tpu_custom_call.1} parent=1 // pred_check_branch
      %27 = sbr.rel (0) target = $region13
    $region12: #{tpu_custom_call.1} parent=1 // pred_region
      %s29 = ssub.s32 4096, 4096
      %30 = vsyncadd [#allocation7], %s29
      %s31 = sshll.u32 [#allocation6], 4
      %s32 = int_to_ptr.vmem [resolvable:$true] %s31
      %37 = dma.hbm_to_vmem [thread:$0]  %s2, 4096, %s32, [#allocation7], 256, 256, 16
    $region13: #{tpu_custom_call.1} parent=1 // pred_fallthru
      _
    // Predicated region
    $region14: #{tpu_custom_call.1} parent=1 // pred_check
      _
    $region15: #{tpu_custom_call.1} parent=1 // pred_check_branch
      %39 = sbr.rel (0) target = $region17
    $region16: #{tpu_custom_call.1} parent=1 // pred_region
      _
    $region17: #{tpu_custom_call.1} parent=1 // pred_fallthru
      _
    // Predicated region
    $region18: #{tpu_custom_call.1} parent=1 // pred_check
      _
    $region19: #{tpu_custom_call.1} parent=1 // pred_check_branch
      %41 = sbr.rel (0) target = $region21
    $region20: #{tpu_custom_call.1} parent=1 // pred_region
      %42 = dma.done [#allocation4], 2048
    $region21: #{tpu_custom_call.1} parent=1 // pred_fallthru
      _
    // Predicated region
    $region22: #{tpu_custom_call.1} parent=1 // pred_check
      _
    $region23: #{tpu_custom_call.1} parent=1 // pred_check_branch
      %44 = sbr.rel (0) target = $region25
    $region24: #{tpu_custom_call.1} parent=1 // pred_region
      %45 = dma.done [#allocation7], 4096
    $region25: #{tpu_custom_call.1} parent=1 // pred_fallthru
      _
    %p46 = scmp.eq.s32.totalorder 0, 0
    // Predicated region
    $region26: #{tpu_custom_call.1} parent=1 // pred_check
      %p47 = pneg %p46
    $region27: #{tpu_custom_call.1} parent=1 // pred_check_branch
      %49 = sbr.rel (%p47) target = $region29
    $region28: #{tpu_custom_call.1} parent=1 // pred_region
      %50 = vst [vmem:[#allocation2] sm:$0xff] 0.0
    $region29: #{tpu_custom_call.1} parent=1 // pred_fallthru
      _
    %v51 = vld [vmem:[#allocation6] sm:$0xff]
    %v52 = vld [vmem:[#allocation6 + $0x8] sm:$0xff]
    %v53 = vld [vmem:[#allocation6 + $0x10] sm:$0xff]
    %v54 = vld [vmem:[#allocation6 + $0x18] sm:$0xff]
    %v55 = vld [vmem:[#allocation6 + $0x20] sm:$0xff]
    %v56 = vld [vmem:[#allocation6 + $0x28] sm:$0xff]
    %v57 = vld [vmem:[#allocation6 + $0x30] sm:$0xff]
    %v58 = vld [vmem:[#allocation6 + $0x38] sm:$0xff]
    %v59 = vld [vmem:[#allocation6 + $0x40] sm:$0xff]
    %v60 = vld [vmem:[#allocation6 + $0x48] sm:$0xff]
    %v61 = vld [vmem:[#allocation6 + $0x50] sm:$0xff]
    %v62 = vld [vmem:[#allocation6 + $0x58] sm:$0xff]
    %v63 = vld [vmem:[#allocation6 + $0x60] sm:$0xff]
    %v64 = vld [vmem:[#allocation6 + $0x68] sm:$0xff]
    %v65 = vld [vmem:[#allocation6 + $0x70] sm:$0xff]
    %v66 = vld [vmem:[#allocation6 + $0x78] sm:$0xff]
    %v67 = vld [vmem:[#allocation6 + $0x80] sm:$0xff]
    %v68 = vld [vmem:[#allocation6 + $0x88] sm:$0xff]
    %v69 = vld [vmem:[#allocation6 + $0x90] sm:$0xff]
    %v70 = vld [vmem:[#allocation6 + $0x98] sm:$0xff]
    %v71 = vld [vmem:[#allocation6 + $0xa0] sm:$0xff]
    %v72 = vld [vmem:[#allocation6 + $0xa8] sm:$0xff]
    %v73 = vld [vmem:[#allocation6 + $0xb0] sm:$0xff]
    %v74 = vld [vmem:[#allocation6 + $0xb8] sm:$0xff]
    %v75 = vld [vmem:[#allocation6 + $0xc0] sm:$0xff]
    %v76 = vld [vmem:[#allocation6 + $0xc8] sm:$0xff]
    %v77 = vld [vmem:[#allocation6 + $0xd0] sm:$0xff]
    %v78 = vld [vmem:[#allocation6 + $0xd8] sm:$0xff]
    %v79 = vld [vmem:[#allocation6 + $0xe0] sm:$0xff]
    %v80 = vld [vmem:[#allocation6 + $0xe8] sm:$0xff]
    %v81 = vld [vmem:[#allocation6 + $0xf0] sm:$0xff]
    %v82 = vld [vmem:[#allocation6 + $0xf8] sm:$0xff]
    %v83 = vld [vmem:[%s3] sm:$0x3]
    %v85 = vlaneseq
    %v86 = vshrl.u32 %v85, 7
    %v87 = vsub.s32 0, %v86
    %v88 = vrot.slane %v83, %v87
    %v89 = vlaneseq
    %v90 = vshrl.u32 %v89, 7
    %v91 = vsub.s32 1, %v90
    %v92 = vrot.slane %v83, %v91
    %v95 = vld [vmem:[#allocation2] sm:$0xff]
    %v96 = vld [vmem:[#allocation3] sm:$0xff]
    %v97 = vld [vmem:[#allocation3 + $0x8] sm:$0xff]
    %v98 = vld [vmem:[%s1] sm:$0xff]
    %99 = vmatprep.subr.mxu0 %v52
    %100 = vmatpush1.msra.mxu0 %v51
    %101 = vmatprep.subr.mxu0 %v54
    %102 = vmatpush1.msra.mxu0 %v53
    %103 = vmatprep.subr.mxu0 %v56
    %104 = vmatpush1.msra.mxu0 %v55
    %105 = vmatprep.subr.mxu0 %v58
    %106 = vmatpush1.msra.mxu0 %v57
    %107 = vmatprep.subr.mxu0 %v60
    %108 = vmatpush1.msra.mxu0 %v59
    %109 = vmatprep.subr.mxu0 %v62
    %110 = vmatpush1.msra.mxu0 %v61
    %111 = vmatprep.subr.mxu0 %v64
    %112 = vmatpush1.msra.mxu0 %v63
    %113 = vmatprep.subr.mxu0 %v66
    %114 = vmatpush1.msra.mxu0 %v65
    %115 = vmatprep.subr.mxu0 %v68
    %116 = vmatpush1.msra.mxu0 %v67
    %117 = vmatprep.subr.mxu0 %v70
    %118 = vmatpush1.msra.mxu0 %v69
    %119 = vmatprep.subr.mxu0 %v72
    %120 = vmatpush1.msra.mxu0 %v71
    %121 = vmatprep.subr.mxu0 %v74
    %122 = vmatpush1.msra.mxu0 %v73
    %123 = vmatprep.subr.mxu0 %v76
    %124 = vmatpush1.msra.mxu0 %v75
    %125 = vmatprep.subr.mxu0 %v78
    %126 = vmatpush1.msra.mxu0 %v77
    %127 = vmatprep.subr.mxu0 %v80
    %128 = vmatpush1.msra.mxu0 %v79
    %129 = vmatprep.subr.mxu0 %v82
    %130 = vmatpush1.msra.mxu0 %v81
    %131 = vmatprep.subr.mxu0 0.0
    %132 = vmatpush1.msra.mxu0 0.0
    %133 = vmatprep.subr.mxu0 0.0
    %134 = vmatpush1.msra.mxu0 0.0
    %135 = vmatprep.subr.mxu0 0.0
    %136 = vmatpush1.msra.mxu0 0.0
    %137 = vmatprep.subr.mxu0 0.0
    %138 = vmatpush1.msra.mxu0 0.0
    %139 = vmatprep.subr.mxu0 0.0
    %140 = vmatpush1.msra.mxu0 0.0
    %141 = vmatprep.subr.mxu0 0.0
    %142 = vmatpush1.msra.mxu0 0.0
    %143 = vmatprep.subr.mxu0 0.0
    %144 = vmatpush1.msra.mxu0 0.0
    %145 = vmatprep.subr.mxu0 0.0
    %146 = vmatpush1.msra.mxu0 0.0
    %147 = vmatprep.subr.mxu0 0.0
    %148 = vmatpush1.msra.mxu0 0.0
    %149 = vmatprep.subr.mxu0 0.0
    %150 = vmatpush1.msra.mxu0 0.0
    %151 = vmatprep.subr.mxu0 0.0
    %152 = vmatpush1.msra.mxu0 0.0
    %153 = vmatprep.subr.mxu0 0.0
    %154 = vmatpush1.msra.mxu0 0.0
    %155 = vmatprep.subr.mxu0 0.0
    %156 = vmatpush1.msra.mxu0 0.0
    %157 = vmatprep.subr.mxu0 0.0
    %158 = vmatpush1.msra.mxu0 0.0
    %159 = vmatprep.subr.mxu0 0.0
    %160 = vmatpush1.msra.mxu0 0.0
    %161 = vmatprep.subr.mxu0 0.0
    %162 = vmatpush1.msra.mxu0 0.0
    %163 = vmatprep.mubr.f32.mxu0 0.0
    %164 = vmatmul.mubr.f32.gmra.mrb[0].mxu0 %v95
    %v165 = vpop.f32.mrb[0].mxu0
    %v166 = vadd.f32 %v88, %v165
    %v167 = vpop.f32.mrb[0].mxu0
    %v168 = vadd.f32 %v92, %v167
    %169 = vdwg.mxu0
    %v170 = vadd.f32 %v96, %v166
    %v171 = vxor.u32 %v170, 2147483648
    %v172 = vmul.f32 %v171, 1.442695
    %v173 = vpow.pop %v172
    %v174 = vadd.f32 %v173, 1.0
    %v175 = vrcp.pop %v174
    %v176 = vmul.f32 1.0, %v175
    %v177 = vmul.f32 %v176, %v168
    %v178 = vadd.f32 %v97, %v177
    %v179 = vtanh.pop %v178
    %v180 = vsub.f32 1.0, %v98
    %182 = vset.pattern.permute.xlu0 0
    %183 = vperm.xlu0 %182, %v180
    %v184 = vpop.permute.xlu0 %183
    %v186 = vmul.f32 %v184, %v95
    %188 = vset.pattern.permute.xlu0 0
    %189 = vperm.xlu0 %188, %v98
    %v190 = vpop.permute.xlu0 %189
    %v192 = vmul.f32 %v190, %v179
    %v193 = vadd.f32 %v186, %v192
    %194 = vset.pattern.permute.xlu0 1
    %195 = vperm.xlu0 %194, %v98
    %v196 = vpop.permute.xlu0 %195
    %v198 = vmul.f32 %v196, %v193
    %199 = vst [vmem:[#allocation8] sm:$0xff] %v198
    %200 = vset.pattern.permute.xlu0 1
    %201 = vperm.xlu0 %200, %v180
    %v202 = vpop.permute.xlu0 %201
    %v204 = vmul.f32 %v202, %v95
    %v205 = vadd.f32 %v198, %v204
    %s206 = scalar_lea.vmem [#allocation3], 16
    %v207 = vld [vmem:[%s206] sm:$0xff]
    %v208 = vld [vmem:[%s206 + $0x8] sm:$0xff]
    %s209 = scalar_lea.vmem %s1, 8
    %v210 = vld [vmem:[%s209] sm:$0xff]
    %211 = vmatprep.subr.mxu0 %v52
    %212 = vmatpush1.msra.mxu0 %v51
    %213 = vmatprep.subr.mxu0 %v54
    %214 = vmatpush1.msra.mxu0 %v53
    %215 = vmatprep.subr.mxu0 %v56
    %216 = vmatpush1.msra.mxu0 %v55
    %217 = vmatprep.subr.mxu0 %v58
    %218 = vmatpush1.msra.mxu0 %v57
    %219 = vmatprep.subr.mxu0 %v60
    %220 = vmatpush1.msra.mxu0 %v59
    %221 = vmatprep.subr.mxu0 %v62
    %222 = vmatpush1.msra.mxu0 %v61
    %223 = vmatprep.subr.mxu0 %v64
    %224 = vmatpush1.msra.mxu0 %v63
    %225 = vmatprep.subr.mxu0 %v66
    %226 = vmatpush1.msra.mxu0 %v65
    %227 = vmatprep.subr.mxu0 %v68
    %228 = vmatpush1.msra.mxu0 %v67
    %229 = vmatprep.subr.mxu0 %v70
    %230 = vmatpush1.msra.mxu0 %v69
    %231 = vmatprep.subr.mxu0 %v72
    %232 = vmatpush1.msra.mxu0 %v71
    %233 = vmatprep.subr.mxu0 %v74
    %234 = vmatpush1.msra.mxu0 %v73
    %235 = vmatprep.subr.mxu0 %v76
    %236 = vmatpush1.msra.mxu0 %v75
    %237 = vmatprep.subr.mxu0 %v78
    %238 = vmatpush1.msra.mxu0 %v77
    %239 = vmatprep.subr.mxu0 %v80
    %240 = vmatpush1.msra.mxu0 %v79
    %241 = vmatprep.subr.mxu0 %v82
    %242 = vmatpush1.msra.mxu0 %v81
    %243 = vmatprep.subr.mxu0 0.0
    %244 = vmatpush1.msra.mxu0 0.0
    %245 = vmatprep.subr.mxu0 0.0
    %246 = vmatpush1.msra.mxu0 0.0
    %247 = vmatprep.subr.mxu0 0.0
    %248 = vmatpush1.msra.mxu0 0.0
    %249 = vmatprep.subr.mxu0 0.0
    %250 = vmatpush1.msra.mxu0 0.0
    %251 = vmatprep.subr.mxu0 0.0
    %252 = vmatpush1.msra.mxu0 0.0
    %253 = vmatprep.subr.mxu0 0.0
    %254 = vmatpush1.msra.mxu0 0.0
    %255 = vmatprep.subr.mxu0 0.0
    %256 = vmatpush1.msra.mxu0 0.0
    %257 = vmatprep.subr.mxu0 0.0
    %258 = vmatpush1.msra.mxu0 0.0
    %259 = vmatprep.subr.mxu0 0.0
    %260 = vmatpush1.msra.mxu0 0.0
    %261 = vmatprep.subr.mxu0 0.0
    %262 = vmatpush1.msra.mxu0 0.0
    %263 = vmatprep.subr.mxu0 0.0
    %264 = vmatpush1.msra.mxu0 0.0
    %265 = vmatprep.subr.mxu0 0.0
    %266 = vmatpush1.msra.mxu0 0.0
    %267 = vmatprep.subr.mxu0 0.0
    %268 = vmatpush1.msra.mxu0 0.0
    %269 = vmatprep.subr.mxu0 0.0
    %270 = vmatpush1.msra.mxu0 0.0
    %271 = vmatprep.subr.mxu0 0.0
    %272 = vmatpush1.msra.mxu0 0.0
    %273 = vmatprep.subr.mxu0 0.0
    %274 = vmatpush1.msra.mxu0 0.0
    %275 = vmatprep.mubr.f32.mxu0 0.0
    %276 = vmatmul.mubr.f32.gmra.mrb[0].mxu0 %v205
    %v277 = vpop.f32.mrb[0].mxu0
    %v278 = vadd.f32 %v88, %v277
    %v279 = vpop.f32.mrb[0].mxu0
    %v280 = vadd.f32 %v92, %v279
    %281 = vdwg.mxu0
    %v282 = vadd.f32 %v207, %v278
    %v283 = vxor.u32 %v282, 2147483648
    %v284 = vmul.f32 %v283, 1.442695
    %v285 = vpow.pop %v284
    %v286 = vadd.f32 %v285, 1.0
    %v287 = vrcp.pop %v286
    %v288 = vmul.f32 1.0, %v287
    %v289 = vmul.f32 %v288, %v280
    %v290 = vadd.f32 %v208, %v289
    %v291 = vtanh.pop %v290
    %v292 = vsub.f32 1.0, %v210
    %294 = vset.pattern.permute.xlu0 0
    %295 = vperm.xlu0 %294, %v292
    %v296 = vpop.permute.xlu0 %295
    %v298 = vmul.f32 %v296, %v205
    %300 = vset.pattern.permute.xlu0 0
    %301 = vperm.xlu0 %300, %v210
    %v302 = vpop.permute.xlu0 %301
    %v304 = vmul.f32 %v302, %v291
    %v305 = vadd.f32 %v298, %v304
    %306 = vset.pattern.permute.xlu0 1
    %307 = vperm.xlu0 %306, %v210
    %v308 = vpop.permute.xlu0 %307
    %v310 = vmul.f32 %v308, %v305
    %s311 = scalar_lea.vmem [#allocation8], 8
    %312 = vst [vmem:[%s311] sm:$0xff] %v310
    %313 = vset.pattern.permute.xlu0 1
    %314 = vperm.xlu0 %313, %v292
    %v315 = vpop.permute.xlu0 %314
    %v317 = vmul.f32 %v315, %v205
    %v318 = vadd.f32 %v310, %v317
    %s319 = scalar_lea.vmem [#allocation3], 32
    %v320 = vld [vmem:[%s319] sm:$0xff]
    %v321 = vld [vmem:[%s319 + $0x8] sm:$0xff]
    %s322 = scalar_lea.vmem %s1, 16
    %v323 = vld [vmem:[%s322] sm:$0xff]
    %324 = vmatprep.subr.mxu0 %v52
    %325 = vmatpush1.msra.mxu0 %v51
    %326 = vmatprep.subr.mxu0 %v54
    %327 = vmatpush1.msra.mxu0 %v53
    %328 = vmatprep.subr.mxu0 %v56
    %329 = vmatpush1.msra.mxu0 %v55
    %330 = vmatprep.subr.mxu0 %v58
    %331 = vmatpush1.msra.mxu0 %v57
    %332 = vmatprep.subr.mxu0 %v60
    %333 = vmatpush1.msra.mxu0 %v59
    %334 = vmatprep.subr.mxu0 %v62
    %335 = vmatpush1.msra.mxu0 %v61
    %336 = vmatprep.subr.mxu0 %v64
    %337 = vmatpush1.msra.mxu0 %v63
    %338 = vmatprep.subr.mxu0 %v66
    %339 = vmatpush1.msra.mxu0 %v65
    %340 = vmatprep.subr.mxu0 %v68
    %341 = vmatpush1.msra.mxu0 %v67
    %342 = vmatprep.subr.mxu0 %v70
    %343 = vmatpush1.msra.mxu0 %v69
    %344 = vmatprep.subr.mxu0 %v72
    %345 = vmatpush1.msra.mxu0 %v71
    %346 = vmatprep.subr.mxu0 %v74
    %347 = vmatpush1.msra.mxu0 %v73
    %348 = vmatprep.subr.mxu0 %v76
    %349 = vmatpush1.msra.mxu0 %v75
    %350 = vmatprep.subr.mxu0 %v78
    %351 = vmatpush1.msra.mxu0 %v77
    %352 = vmatprep.subr.mxu0 %v80
    %353 = vmatpush1.msra.mxu0 %v79
    %354 = vmatprep.subr.mxu0 %v82
    %355 = vmatpush1.msra.mxu0 %v81
    %356 = vmatprep.subr.mxu0 0.0
    %357 = vmatpush1.msra.mxu0 0.0
    %358 = vmatprep.subr.mxu0 0.0
    %359 = vmatpush1.msra.mxu0 0.0
    %360 = vmatprep.subr.mxu0 0.0
    %361 = vmatpush1.msra.mxu0 0.0
    %362 = vmatprep.subr.mxu0 0.0
    %363 = vmatpush1.msra.mxu0 0.0
    %364 = vmatprep.subr.mxu0 0.0
    %365 = vmatpush1.msra.mxu0 0.0
    %366 = vmatprep.subr.mxu0 0.0
    %367 = vmatpush1.msra.mxu0 0.0
    %368 = vmatprep.subr.mxu0 0.0
    %369 = vmatpush1.msra.mxu0 0.0
    %370 = vmatprep.subr.mxu0 0.0
    %371 = vmatpush1.msra.mxu0 0.0
    %372 = vmatprep.subr.mxu0 0.0
    %373 = vmatpush1.msra.mxu0 0.0
    %374 = vmatprep.subr.mxu0 0.0
    %375 = vmatpush1.msra.mxu0 0.0
    %376 = vmatprep.subr.mxu0 0.0
    %377 = vmatpush1.msra.mxu0 0.0
    %378 = vmatprep.subr.mxu0 0.0
    %379 = vmatpush1.msra.mxu0 0.0
    %380 = vmatprep.subr.mxu0 0.0
    %381 = vmatpush1.msra.mxu0 0.0
    %382 = vmatprep.subr.mxu0 0.0
    %383 = vmatpush1.msra.mxu0 0.0
    %384 = vmatprep.subr.mxu0 0.0
    %385 = vmatpush1.msra.mxu0 0.0
    %386 = vmatprep.subr.mxu0 0.0
    %387 = vmatpush1.msra.mxu0 0.0
    %388 = vmatprep.mubr.f32.mxu0 0.0
    %389 = vmatmul.mubr.f32.gmra.mrb[0].mxu0 %v318
    %v390 = vpop.f32.mrb[0].mxu0
    %v391 = vadd.f32 %v88, %v390
    %v392 = vpop.f32.mrb[0].mxu0
    %v393 = vadd.f32 %v92, %v392
    %394 = vdwg.mxu0
    %v395 = vadd.f32 %v320, %v391
    %v396 = vxor.u32 %v395, 2147483648
    %v397 = vmul.f32 %v396, 1.442695
    %v398 = vpow.pop %v397
    %v399 = vadd.f32 %v398, 1.0
    %v400 = vrcp.pop %v399
    %v401 = vmul.f32 1.0, %v400
    %v402 = vmul.f32 %v401, %v393
    %v403 = vadd.f32 %v321, %v402
    %v404 = vtanh.pop %v403
    %v405 = vsub.f32 1.0, %v323
    %407 = vset.pattern.permute.xlu0 0
    %408 = vperm.xlu0 %407, %v405
    %v409 = vpop.permute.xlu0 %408
    %v411 = vmul.f32 %v409, %v318
    %413 = vset.pattern.permute.xlu0 0
    %414 = vperm.xlu0 %413, %v323
    %v415 = vpop.permute.xlu0 %414
    %v417 = vmul.f32 %v415, %v404
    %v418 = vadd.f32 %v411, %v417
    %419 = vset.pattern.permute.xlu0 1
    %420 = vperm.xlu0 %419, %v323
    %v421 = vpop.permute.xlu0 %420
    %v423 = vmul.f32 %v421, %v418
    %s424 = scalar_lea.vmem [#allocation8], 16
    %425 = vst [vmem:[%s424] sm:$0xff] %v423
    %426 = vset.pattern.permute.xlu0 1
    %427 = vperm.xlu0 %426, %v405
    %v428 = vpop.permute.xlu0 %427
    %v430 = vmul.f32 %v428, %v318
    %v431 = vadd.f32 %v423, %v430
    %s432 = scalar_lea.vmem [#allocation3], 48
    %v433 = vld [vmem:[%s432] sm:$0xff]
    %v434 = vld [vmem:[%s432 + $0x8] sm:$0xff]
    %s435 = scalar_lea.vmem %s1, 24
    %v436 = vld [vmem:[%s435] sm:$0xff]
    %437 = vmatprep.subr.mxu0 %v52
    %438 = vmatpush1.msra.mxu0 %v51
    %439 = vmatprep.subr.mxu0 %v54
    %440 = vmatpush1.msra.mxu0 %v53
    %441 = vmatprep.subr.mxu0 %v56
    %442 = vmatpush1.msra.mxu0 %v55
    %443 = vmatprep.subr.mxu0 %v58
    %444 = vmatpush1.msra.mxu0 %v57
    %445 = vmatprep.subr.mxu0 %v60
    %446 = vmatpush1.msra.mxu0 %v59
    %447 = vmatprep.subr.mxu0 %v62
    %448 = vmatpush1.msra.mxu0 %v61
    %449 = vmatprep.subr.mxu0 %v64
    %450 = vmatpush1.msra.mxu0 %v63
    %451 = vmatprep.subr.mxu0 %v66
    %452 = vmatpush1.msra.mxu0 %v65
    %453 = vmatprep.subr.mxu0 %v68
    %454 = vmatpush1.msra.mxu0 %v67
    %455 = vmatprep.subr.mxu0 %v70
    %456 = vmatpush1.msra.mxu0 %v69
    %457 = vmatprep.subr.mxu0 %v72
    %458 = vmatpush1.msra.mxu0 %v71
    %459 = vmatprep.subr.mxu0 %v74
    %460 = vmatpush1.msra.mxu0 %v73
    %461 = vmatprep.subr.mxu0 %v76
    %462 = vmatpush1.msra.mxu0 %v75
    %463 = vmatprep.subr.mxu0 %v78
    %464 = vmatpush1.msra.mxu0 %v77
    %465 = vmatprep.subr.mxu0 %v80
    %466 = vmatpush1.msra.mxu0 %v79
    %467 = vmatprep.subr.mxu0 %v82
    %468 = vmatpush1.msra.mxu0 %v81
    %469 = vmatprep.subr.mxu0 0.0
    %470 = vmatpush1.msra.mxu0 0.0
    %471 = vmatprep.subr.mxu0 0.0
    %472 = vmatpush1.msra.mxu0 0.0
    %473 = vmatprep.subr.mxu0 0.0
    %474 = vmatpush1.msra.mxu0 0.0
    %475 = vmatprep.subr.mxu0 0.0
    %476 = vmatpush1.msra.mxu0 0.0
    %477 = vmatprep.subr.mxu0 0.0
    %478 = vmatpush1.msra.mxu0 0.0
    %479 = vmatprep.subr.mxu0 0.0
    %480 = vmatpush1.msra.mxu0 0.0
    %481 = vmatprep.subr.mxu0 0.0
    %482 = vmatpush1.msra.mxu0 0.0
    %483 = vmatprep.subr.mxu0 0.0
    %484 = vmatpush1.msra.mxu0 0.0
    %485 = vmatprep.subr.mxu0 0.0
    %486 = vmatpush1.msra.mxu0 0.0
    %487 = vmatprep.subr.mxu0 0.0
    %488 = vmatpush1.msra.mxu0 0.0
    %489 = vmatprep.subr.mxu0 0.0
    %490 = vmatpush1.msra.mxu0 0.0
    %491 = vmatprep.subr.mxu0 0.0
    %492 = vmatpush1.msra.mxu0 0.0
    %493 = vmatprep.subr.mxu0 0.0
    %494 = vmatpush1.msra.mxu0 0.0
    %495 = vmatprep.subr.mxu0 0.0
    %496 = vmatpush1.msra.mxu0 0.0
    %497 = vmatprep.subr.mxu0 0.0
    %498 = vmatpush1.msra.mxu0 0.0
    %499 = vmatprep.subr.mxu0 0.0
    %500 = vmatpush1.msra.mxu0 0.0
    %501 = vmatprep.mubr.f32.mxu0 0.0
    %502 = vmatmul.mubr.f32.gmra.mrb[0].mxu0 %v431
    %v503 = vpop.f32.mrb[0].mxu0
    %v504 = vadd.f32 %v88, %v503
    %v505 = vpop.f32.mrb[0].mxu0
    %v506 = vadd.f32 %v92, %v505
    %507 = vdwg.mxu0
    %v508 = vadd.f32 %v433, %v504
    %v509 = vxor.u32 %v508, 2147483648
    %v510 = vmul.f32 %v509, 1.442695
    %v511 = vpow.pop %v510
    %v512 = vadd.f32 %v511, 1.0
    %v513 = vrcp.pop %v512
    %v514 = vmul.f32 1.0, %v513
    %v515 = vmul.f32 %v514, %v506
    %v516 = vadd.f32 %v434, %v515
    %v517 = vtanh.pop %v516
    %v518 = vsub.f32 1.0, %v436
    %520 = vset.pattern.permute.xlu0 0
    %521 = vperm.xlu0 %520, %v518
    %v522 = vpop.permute.xlu0 %521
    %v524 = vmul.f32 %v522, %v431
    %526 = vset.pattern.permute.xlu0 0
    %527 = vperm.xlu0 %526, %v436
    %v528 = vpop.permute.xlu0 %527
    %v530 = vmul.f32 %v528, %v517
    %v531 = vadd.f32 %v524, %v530
    %532 = vset.pattern.permute.xlu0 1
    %533 = vperm.xlu0 %532, %v436
    %v534 = vpop.permute.xlu0 %533
    %v536 = vmul.f32 %v534, %v531
    %s537 = scalar_lea.vmem [#allocation8], 24
    %538 = vst [vmem:[%s537] sm:$0xff] %v536
    %539 = vset.pattern.permute.xlu0 1
    %540 = vperm.xlu0 %539, %v518
    %v541 = vpop.permute.xlu0 %540
    %v543 = vmul.f32 %v541, %v431
    %v544 = vadd.f32 %v536, %v543
    %s545 = scalar_lea.vmem [#allocation3], 64
    %v546 = vld [vmem:[%s545] sm:$0xff]
    %v547 = vld [vmem:[%s545 + $0x8] sm:$0xff]
    %s548 = scalar_lea.vmem %s1, 32
    %v549 = vld [vmem:[%s548] sm:$0xff]
    %550 = vmatprep.subr.mxu0 %v52
    %551 = vmatpush1.msra.mxu0 %v51
    %552 = vmatprep.subr.mxu0 %v54
    %553 = vmatpush1.msra.mxu0 %v53
    %554 = vmatprep.subr.mxu0 %v56
    %555 = vmatpush1.msra.mxu0 %v55
    %556 = vmatprep.subr.mxu0 %v58
    %557 = vmatpush1.msra.mxu0 %v57
    %558 = vmatprep.subr.mxu0 %v60
    %559 = vmatpush1.msra.mxu0 %v59
    %560 = vmatprep.subr.mxu0 %v62
    %561 = vmatpush1.msra.mxu0 %v61
    %562 = vmatprep.subr.mxu0 %v64
    %563 = vmatpush1.msra.mxu0 %v63
    %564 = vmatprep.subr.mxu0 %v66
    %565 = vmatpush1.msra.mxu0 %v65
    %566 = vmatprep.subr.mxu0 %v68
    %567 = vmatpush1.msra.mxu0 %v67
    %568 = vmatprep.subr.mxu0 %v70
    %569 = vmatpush1.msra.mxu0 %v69
    %570 = vmatprep.subr.mxu0 %v72
    %571 = vmatpush1.msra.mxu0 %v71
    %572 = vmatprep.subr.mxu0 %v74
    %573 = vmatpush1.msra.mxu0 %v73
    %574 = vmatprep.subr.mxu0 %v76
    %575 = vmatpush1.msra.mxu0 %v75
    %576 = vmatprep.subr.mxu0 %v78
    %577 = vmatpush1.msra.mxu0 %v77
    %578 = vmatprep.subr.mxu0 %v80
    %579 = vmatpush1.msra.mxu0 %v79
    %580 = vmatprep.subr.mxu0 %v82
    %581 = vmatpush1.msra.mxu0 %v81
    %582 = vmatprep.subr.mxu0 0.0
    %583 = vmatpush1.msra.mxu0 0.0
    %584 = vmatprep.subr.mxu0 0.0
    %585 = vmatpush1.msra.mxu0 0.0
    %586 = vmatprep.subr.mxu0 0.0
    %587 = vmatpush1.msra.mxu0 0.0
    %588 = vmatprep.subr.mxu0 0.0
    %589 = vmatpush1.msra.mxu0 0.0
    %590 = vmatprep.subr.mxu0 0.0
    %591 = vmatpush1.msra.mxu0 0.0
    %592 = vmatprep.subr.mxu0 0.0
    %593 = vmatpush1.msra.mxu0 0.0
    %594 = vmatprep.subr.mxu0 0.0
    %595 = vmatpush1.msra.mxu0 0.0
    %596 = vmatprep.subr.mxu0 0.0
    %597 = vmatpush1.msra.mxu0 0.0
    %598 = vmatprep.subr.mxu0 0.0
    %599 = vmatpush1.msra.mxu0 0.0
    %600 = vmatprep.subr.mxu0 0.0
    %601 = vmatpush1.msra.mxu0 0.0
    %602 = vmatprep.subr.mxu0 0.0
    %603 = vmatpush1.msra.mxu0 0.0
    %604 = vmatprep.subr.mxu0 0.0
    %605 = vmatpush1.msra.mxu0 0.0
    %606 = vmatprep.subr.mxu0 0.0
    %607 = vmatpush1.msra.mxu0 0.0
    %608 = vmatprep.subr.mxu0 0.0
    %609 = vmatpush1.msra.mxu0 0.0
    %610 = vmatprep.subr.mxu0 0.0
    %611 = vmatpush1.msra.mxu0 0.0
    %612 = vmatprep.subr.mxu0 0.0
    %613 = vmatpush1.msra.mxu0 0.0
    %614 = vmatprep.mubr.f32.mxu0 0.0
    %615 = vmatmul.mubr.f32.gmra.mrb[0].mxu0 %v544
    %v616 = vpop.f32.mrb[0].mxu0
    %v617 = vadd.f32 %v88, %v616
    %v618 = vpop.f32.mrb[0].mxu0
    %v619 = vadd.f32 %v92, %v618
    %620 = vdwg.mxu0
    %v621 = vadd.f32 %v546, %v617
    %v622 = vxor.u32 %v621, 2147483648
    %v623 = vmul.f32 %v622, 1.442695
    %v624 = vpow.pop %v623
    %v625 = vadd.f32 %v624, 1.0
    %v626 = vrcp.pop %v625
    %v627 = vmul.f32 1.0, %v626
    %v628 = vmul.f32 %v627, %v619
    %v629 = vadd.f32 %v547, %v628
    %v630 = vtanh.pop %v629
    %v631 = vsub.f32 1.0, %v549
    %633 = vset.pattern.permute.xlu0 0
    %634 = vperm.xlu0 %633, %v631
    %v635 = vpop.permute.xlu0 %634
    %v637 = vmul.f32 %v635, %v544
    %639 = vset.pattern.permute.xlu0 0
    %640 = vperm.xlu0 %639, %v549
    %v641 = vpop.permute.xlu0 %640
    %v643 = vmul.f32 %v641, %v630
    %v644 = vadd.f32 %v637, %v643
    %645 = vset.pattern.permute.xlu0 1
    %646 = vperm.xlu0 %645, %v549
    %v647 = vpop.permute.xlu0 %646
    %v649 = vmul.f32 %v647, %v644
    %s650 = scalar_lea.vmem [#allocation8], 32
    %651 = vst [vmem:[%s650] sm:$0xff] %v649
    %652 = vset.pattern.permute.xlu0 1
    %653 = vperm.xlu0 %652, %v631
    %v654 = vpop.permute.xlu0 %653
    %v656 = vmul.f32 %v654, %v544
    %v657 = vadd.f32 %v649, %v656
    %s658 = scalar_lea.vmem [#allocation3], 80
    %v659 = vld [vmem:[%s658] sm:$0xff]
    %v660 = vld [vmem:[%s658 + $0x8] sm:$0xff]
    %s661 = scalar_lea.vmem %s1, 40
    %v662 = vld [vmem:[%s661] sm:$0xff]
    %663 = vmatprep.subr.mxu0 %v52
    %664 = vmatpush1.msra.mxu0 %v51
    %665 = vmatprep.subr.mxu0 %v54
    %666 = vmatpush1.msra.mxu0 %v53
    %667 = vmatprep.subr.mxu0 %v56
    %668 = vmatpush1.msra.mxu0 %v55
    %669 = vmatprep.subr.mxu0 %v58
    %670 = vmatpush1.msra.mxu0 %v57
    %671 = vmatprep.subr.mxu0 %v60
    %672 = vmatpush1.msra.mxu0 %v59
    %673 = vmatprep.subr.mxu0 %v62
    %674 = vmatpush1.msra.mxu0 %v61
    %675 = vmatprep.subr.mxu0 %v64
    %676 = vmatpush1.msra.mxu0 %v63
    %677 = vmatprep.subr.mxu0 %v66
    %678 = vmatpush1.msra.mxu0 %v65
    %679 = vmatprep.subr.mxu0 %v68
    %680 = vmatpush1.msra.mxu0 %v67
    %681 = vmatprep.subr.mxu0 %v70
    %682 = vmatpush1.msra.mxu0 %v69
    %683 = vmatprep.subr.mxu0 %v72
    %684 = vmatpush1.msra.mxu0 %v71
    %685 = vmatprep.subr.mxu0 %v74
    %686 = vmatpush1.msra.mxu0 %v73
    %687 = vmatprep.subr.mxu0 %v76
    %688 = vmatpush1.msra.mxu0 %v75
    %689 = vmatprep.subr.mxu0 %v78
    %690 = vmatpush1.msra.mxu0 %v77
    %691 = vmatprep.subr.mxu0 %v80
    %692 = vmatpush1.msra.mxu0 %v79
    %693 = vmatprep.subr.mxu0 %v82
    %694 = vmatpush1.msra.mxu0 %v81
    %695 = vmatprep.subr.mxu0 0.0
    %696 = vmatpush1.msra.mxu0 0.0
    %697 = vmatprep.subr.mxu0 0.0
    %698 = vmatpush1.msra.mxu0 0.0
    %699 = vmatprep.subr.mxu0 0.0
    %700 = vmatpush1.msra.mxu0 0.0
    %701 = vmatprep.subr.mxu0 0.0
    %702 = vmatpush1.msra.mxu0 0.0
    %703 = vmatprep.subr.mxu0 0.0
    %704 = vmatpush1.msra.mxu0 0.0
    %705 = vmatprep.subr.mxu0 0.0
    %706 = vmatpush1.msra.mxu0 0.0
    %707 = vmatprep.subr.mxu0 0.0
    %708 = vmatpush1.msra.mxu0 0.0
    %709 = vmatprep.subr.mxu0 0.0
    %710 = vmatpush1.msra.mxu0 0.0
    %711 = vmatprep.subr.mxu0 0.0
    %712 = vmatpush1.msra.mxu0 0.0
    %713 = vmatprep.subr.mxu0 0.0
    %714 = vmatpush1.msra.mxu0 0.0
    %715 = vmatprep.subr.mxu0 0.0
    %716 = vmatpush1.msra.mxu0 0.0
    %717 = vmatprep.subr.mxu0 0.0
    %718 = vmatpush1.msra.mxu0 0.0
    %719 = vmatprep.subr.mxu0 0.0
    %720 = vmatpush1.msra.mxu0 0.0
    %721 = vmatprep.subr.mxu0 0.0
    %722 = vmatpush1.msra.mxu0 0.0
    %723 = vmatprep.subr.mxu0 0.0
    %724 = vmatpush1.msra.mxu0 0.0
    %725 = vmatprep.subr.mxu0 0.0
    %726 = vmatpush1.msra.mxu0 0.0
    %727 = vmatprep.mubr.f32.mxu0 0.0
    %728 = vmatmul.mubr.f32.gmra.mrb[0].mxu0 %v657
    %v729 = vpop.f32.mrb[0].mxu0
    %v730 = vadd.f32 %v88, %v729
    %v731 = vpop.f32.mrb[0].mxu0
    %v732 = vadd.f32 %v92, %v731
    %733 = vdwg.mxu0
    %v734 = vadd.f32 %v659, %v730
    %v735 = vxor.u32 %v734, 2147483648
    %v736 = vmul.f32 %v735, 1.442695
    %v737 = vpow.pop %v736
    %v738 = vadd.f32 %v737, 1.0
    %v739 = vrcp.pop %v738
    %v740 = vmul.f32 1.0, %v739
    %v741 = vmul.f32 %v740, %v732
    %v742 = vadd.f32 %v660, %v741
    %v743 = vtanh.pop %v742
    %v744 = vsub.f32 1.0, %v662
    %746 = vset.pattern.permute.xlu0 0
    %747 = vperm.xlu0 %746, %v744
    %v748 = vpop.permute.xlu0 %747
    %v750 = vmul.f32 %v748, %v657
    %752 = vset.pattern.permute.xlu0 0
    %753 = vperm.xlu0 %752, %v662
    %v754 = vpop.permute.xlu0 %753
    %v756 = vmul.f32 %v754, %v743
    %v757 = vadd.f32 %v750, %v756
    %758 = vset.pattern.permute.xlu0 1
    %759 = vperm.xlu0 %758, %v662
    %v760 = vpop.permute.xlu0 %759
    %v762 = vmul.f32 %v760, %v757
    %s763 = scalar_lea.vmem [#allocation8], 40
    %764 = vst [vmem:[%s763] sm:$0xff] %v762
    %765 = vset.pattern.permute.xlu0 1
    %766 = vperm.xlu0 %765, %v744
    %v767 = vpop.permute.xlu0 %766
    %v769 = vmul.f32 %v767, %v657
    %v770 = vadd.f32 %v762, %v769
    %s771 = scalar_lea.vmem [#allocation3], 96
    %v772 = vld [vmem:[%s771] sm:$0xff]
    %v773 = vld [vmem:[%s771 + $0x8] sm:$0xff]
    %s774 = scalar_lea.vmem %s1, 48
    %v775 = vld [vmem:[%s774] sm:$0xff]
    %776 = vmatprep.subr.mxu0 %v52
    %777 = vmatpush1.msra.mxu0 %v51
    %778 = vmatprep.subr.mxu0 %v54
    %779 = vmatpush1.msra.mxu0 %v53
    %780 = vmatprep.subr.mxu0 %v56
    %781 = vmatpush1.msra.mxu0 %v55
    %782 = vmatprep.subr.mxu0 %v58
    %783 = vmatpush1.msra.mxu0 %v57
    %784 = vmatprep.subr.mxu0 %v60
    %785 = vmatpush1.msra.mxu0 %v59
    %786 = vmatprep.subr.mxu0 %v62
    %787 = vmatpush1.msra.mxu0 %v61
    %788 = vmatprep.subr.mxu0 %v64
    %789 = vmatpush1.msra.mxu0 %v63
    %790 = vmatprep.subr.mxu0 %v66
    %791 = vmatpush1.msra.mxu0 %v65
    %792 = vmatprep.subr.mxu0 %v68
    %793 = vmatpush1.msra.mxu0 %v67
    %794 = vmatprep.subr.mxu0 %v70
    %795 = vmatpush1.msra.mxu0 %v69
    %796 = vmatprep.subr.mxu0 %v72
    %797 = vmatpush1.msra.mxu0 %v71
    %798 = vmatprep.subr.mxu0 %v74
    %799 = vmatpush1.msra.mxu0 %v73
    %800 = vmatprep.subr.mxu0 %v76
    %801 = vmatpush1.msra.mxu0 %v75
    %802 = vmatprep.subr.mxu0 %v78
    %803 = vmatpush1.msra.mxu0 %v77
    %804 = vmatprep.subr.mxu0 %v80
    %805 = vmatpush1.msra.mxu0 %v79
    %806 = vmatprep.subr.mxu0 %v82
    %807 = vmatpush1.msra.mxu0 %v81
    %808 = vmatprep.subr.mxu0 0.0
    %809 = vmatpush1.msra.mxu0 0.0
    %810 = vmatprep.subr.mxu0 0.0
    %811 = vmatpush1.msra.mxu0 0.0
    %812 = vmatprep.subr.mxu0 0.0
    %813 = vmatpush1.msra.mxu0 0.0
    %814 = vmatprep.subr.mxu0 0.0
    %815 = vmatpush1.msra.mxu0 0.0
    %816 = vmatprep.subr.mxu0 0.0
    %817 = vmatpush1.msra.mxu0 0.0
    %818 = vmatprep.subr.mxu0 0.0
    %819 = vmatpush1.msra.mxu0 0.0
    %820 = vmatprep.subr.mxu0 0.0
    %821 = vmatpush1.msra.mxu0 0.0
    %822 = vmatprep.subr.mxu0 0.0
    %823 = vmatpush1.msra.mxu0 0.0
    %824 = vmatprep.subr.mxu0 0.0
    %825 = vmatpush1.msra.mxu0 0.0
    %826 = vmatprep.subr.mxu0 0.0
    %827 = vmatpush1.msra.mxu0 0.0
    %828 = vmatprep.subr.mxu0 0.0
    %829 = vmatpush1.msra.mxu0 0.0
    %830 = vmatprep.subr.mxu0 0.0
    %831 = vmatpush1.msra.mxu0 0.0
    %832 = vmatprep.subr.mxu0 0.0
    %833 = vmatpush1.msra.mxu0 0.0
    %834 = vmatprep.subr.mxu0 0.0
    %835 = vmatpush1.msra.mxu0 0.0
    %836 = vmatprep.subr.mxu0 0.0
    %837 = vmatpush1.msra.mxu0 0.0
    %838 = vmatprep.subr.mxu0 0.0
    %839 = vmatpush1.msra.mxu0 0.0
    %840 = vmatprep.mubr.f32.mxu0 0.0
    %841 = vmatmul.mubr.f32.gmra.mrb[0].mxu0 %v770
    %v842 = vpop.f32.mrb[0].mxu0
    %v843 = vadd.f32 %v88, %v842
    %v844 = vpop.f32.mrb[0].mxu0
    %v845 = vadd.f32 %v92, %v844
    %846 = vdwg.mxu0
    %v847 = vadd.f32 %v772, %v843
    %v848 = vxor.u32 %v847, 2147483648
    %v849 = vmul.f32 %v848, 1.442695
    %v850 = vpow.pop %v849
    %v851 = vadd.f32 %v850, 1.0
    %v852 = vrcp.pop %v851
    %v853 = vmul.f32 1.0, %v852
    %v854 = vmul.f32 %v853, %v845
    %v855 = vadd.f32 %v773, %v854
    %v856 = vtanh.pop %v855
    %v857 = vsub.f32 1.0, %v775
    %859 = vset.pattern.permute.xlu0 0
    %860 = vperm.xlu0 %859, %v857
    %v861 = vpop.permute.xlu0 %860
    %v863 = vmul.f32 %v861, %v770
    %865 = vset.pattern.permute.xlu0 0
    %866 = vperm.xlu0 %865, %v775
    %v867 = vpop.permute.xlu0 %866
    %v869 = vmul.f32 %v867, %v856
    %v870 = vadd.f32 %v863, %v869
    %871 = vset.pattern.permute.xlu0 1
    %872 = vperm.xlu0 %871, %v775
    %v873 = vpop.permute.xlu0 %872
    %v875 = vmul.f32 %v873, %v870
    %s876 = scalar_lea.vmem [#allocation8], 48
    %877 = vst [vmem:[%s876] sm:$0xff] %v875
    %878 = vset.pattern.permute.xlu0 1
    %879 = vperm.xlu0 %878, %v857
    %v880 = vpop.permute.xlu0 %879
    %v882 = vmul.f32 %v880, %v770
    %v883 = vadd.f32 %v875, %v882
    %s884 = scalar_lea.vmem [#allocation3], 112
    %v885 = vld [vmem:[%s884] sm:$0xff]
    %v886 = vld [vmem:[%s884 + $0x8] sm:$0xff]
    %s887 = scalar_lea.vmem %s1, 56
    %v888 = vld [vmem:[%s887] sm:$0xff]
    %889 = vmatprep.subr.mxu0 %v52
    %890 = vmatpush1.msra.mxu0 %v51
    %891 = vmatprep.subr.mxu0 %v54
    %892 = vmatpush1.msra.mxu0 %v53
    %893 = vmatprep.subr.mxu0 %v56
    %894 = vmatpush1.msra.mxu0 %v55
    %895 = vmatprep.subr.mxu0 %v58
    %896 = vmatpush1.msra.mxu0 %v57
    %897 = vmatprep.subr.mxu0 %v60
    %898 = vmatpush1.msra.mxu0 %v59
    %899 = vmatprep.subr.mxu0 %v62
    %900 = vmatpush1.msra.mxu0 %v61
    %901 = vmatprep.subr.mxu0 %v64
    %902 = vmatpush1.msra.mxu0 %v63
    %903 = vmatprep.subr.mxu0 %v66
    %904 = vmatpush1.msra.mxu0 %v65
    %905 = vmatprep.subr.mxu0 %v68
    %906 = vmatpush1.msra.mxu0 %v67
    %907 = vmatprep.subr.mxu0 %v70
    %908 = vmatpush1.msra.mxu0 %v69
    %909 = vmatprep.subr.mxu0 %v72
    %910 = vmatpush1.msra.mxu0 %v71
    %911 = vmatprep.subr.mxu0 %v74
    %912 = vmatpush1.msra.mxu0 %v73
    %913 = vmatprep.subr.mxu0 %v76
    %914 = vmatpush1.msra.mxu0 %v75
    %915 = vmatprep.subr.mxu0 %v78
    %916 = vmatpush1.msra.mxu0 %v77
    %917 = vmatprep.subr.mxu0 %v80
    %918 = vmatpush1.msra.mxu0 %v79
    %919 = vmatprep.subr.mxu0 %v82
    %920 = vmatpush1.msra.mxu0 %v81
    %921 = vmatprep.subr.mxu0 0.0
    %922 = vmatpush1.msra.mxu0 0.0
    %923 = vmatprep.subr.mxu0 0.0
    %924 = vmatpush1.msra.mxu0 0.0
    %925 = vmatprep.subr.mxu0 0.0
    %926 = vmatpush1.msra.mxu0 0.0
    %927 = vmatprep.subr.mxu0 0.0
    %928 = vmatpush1.msra.mxu0 0.0
    %929 = vmatprep.subr.mxu0 0.0
    %930 = vmatpush1.msra.mxu0 0.0
    %931 = vmatprep.subr.mxu0 0.0
    %932 = vmatpush1.msra.mxu0 0.0
    %933 = vmatprep.subr.mxu0 0.0
    %934 = vmatpush1.msra.mxu0 0.0
    %935 = vmatprep.subr.mxu0 0.0
    %936 = vmatpush1.msra.mxu0 0.0
    %937 = vmatprep.subr.mxu0 0.0
    %938 = vmatpush1.msra.mxu0 0.0
    %939 = vmatprep.subr.mxu0 0.0
    %940 = vmatpush1.msra.mxu0 0.0
    %941 = vmatprep.subr.mxu0 0.0
    %942 = vmatpush1.msra.mxu0 0.0
    %943 = vmatprep.subr.mxu0 0.0
    %944 = vmatpush1.msra.mxu0 0.0
    %945 = vmatprep.subr.mxu0 0.0
    %946 = vmatpush1.msra.mxu0 0.0
    %947 = vmatprep.subr.mxu0 0.0
    %948 = vmatpush1.msra.mxu0 0.0
    %949 = vmatprep.subr.mxu0 0.0
    %950 = vmatpush1.msra.mxu0 0.0
    %951 = vmatprep.subr.mxu0 0.0
    %952 = vmatpush1.msra.mxu0 0.0
    %953 = vmatprep.mubr.f32.mxu0 0.0
    %954 = vmatmul.mubr.f32.gmra.mrb[0].mxu0 %v883
    %v955 = vpop.f32.mrb[0].mxu0
    %v956 = vadd.f32 %v88, %v955
    %v957 = vpop.f32.mrb[0].mxu0
    %v958 = vadd.f32 %v92, %v957
    %959 = vdwg.mxu0
    %v960 = vadd.f32 %v885, %v956
    %v961 = vxor.u32 %v960, 2147483648
    %v962 = vmul.f32 %v961, 1.442695
    %v963 = vpow.pop %v962
    %v964 = vadd.f32 %v963, 1.0
    %v965 = vrcp.pop %v964
    %v966 = vmul.f32 1.0, %v965
    %v967 = vmul.f32 %v966, %v958
    %v968 = vadd.f32 %v886, %v967
    %v969 = vtanh.pop %v968
    %v970 = vsub.f32 1.0, %v888
    %972 = vset.pattern.permute.xlu0 0
    %973 = vperm.xlu0 %972, %v970
    %v974 = vpop.permute.xlu0 %973
    %v976 = vmul.f32 %v974, %v883
    %978 = vset.pattern.permute.xlu0 0
    %979 = vperm.xlu0 %978, %v888
    %v980 = vpop.permute.xlu0 %979
    %v982 = vmul.f32 %v980, %v969
    %v983 = vadd.f32 %v976, %v982
    %984 = vset.pattern.permute.xlu0 1
    %985 = vperm.xlu0 %984, %v888
    %v986 = vpop.permute.xlu0 %985
    %v988 = vmul.f32 %v986, %v983
    %s989 = scalar_lea.vmem [#allocation8], 56
    %990 = vst [vmem:[%s989] sm:$0xff] %v988
    %991 = vset.pattern.permute.xlu0 1
    %992 = vperm.xlu0 %991, %v970
    %v993 = vpop.permute.xlu0 %992
    %v995 = vmul.f32 %v993, %v883
    %v996 = vadd.f32 %v988, %v995
    %997 = vst [vmem:[#allocation2] sm:$0xff] %v996
    // Predicated region
    $region30: #{tpu_custom_call.1} parent=1 // pred_check
      _
    $region31: #{tpu_custom_call.1} parent=1 // pred_check_branch
      %999 = sbr.rel (0) target = $region33
    $region32: #{tpu_custom_call.1} parent=1 // pred_region
      %s1001 = ssub.s32 1024, 1024
      %1002 = vsyncadd [#allocation5], %s1001
      %s1003 = sshll.u32 [#allocation8], 4
      %s1004 = int_to_ptr.vmem [resolvable:$true] %s1003
      %1009 = dma.vmem_to_hbm [thread:$0]  %s1004, 1024, %s4, [#allocation5], 128, 128, 8
    $region33: #{tpu_custom_call.1} parent=1 // pred_fallthru
      _
    // Predicated region
    $region34: #{tpu_custom_call.1} parent=1 // pred_check
      _
    $region35: #{tpu_custom_call.1} parent=1 // pred_check_branch
      %1011 = sbr.rel (0) target = $region37
    $region36: #{tpu_custom_call.1} parent=1 // pred_region
      %1012 = dma.done [#allocation5], 1024
    $region37: #{tpu_custom_call.1} parent=1 // pred_fallthru
      _
    %1013 = vsyncpa [#allocation4], 1
    %1014 = vsyncpa [#allocation7], 1
    %1015 = vsyncpa [#allocation5], 1

</llo_original>
